<compile_context>
chip_gen: v7x
topology: tpu7x:2x2x1
jax: 0.10.0
libtpu: 0.0.40
codegen_flags: <defaults>
</compile_context>

<pallas_src>
import jax
import jax.numpy as jnp
from jax.experimental import pallas as pl
from jax.experimental.pallas import tpu as pltpu


def _round_up_128(n):
    return ((n + 127) // 128) * 128


def _lstm_mlp_kernel(x_ref,      # (T*B, D)   time-major input, flattened
                     wih_ref,    # (D, 8U)    [fwd i,f,g,o | bwd i,f,g,o] input weights
                     whh_ref,    # (U, 4U)    forward recurrent weights
                     w1_ref,     # (2U, 2H)   dense1
                     w2_ref,     # (2H, H)    dense2 with bn1 (eval) folded in
                     w3_ref,     # (H, C)     output layer with bn2 (eval) folded in
                     bias_ref,   # (1, P)     packed biases, 128-lane-aligned segments
                     out_ref):   # (B, C)     logits
    TB, _ = x_ref.shape
    U = whh_ref.shape[0]
    G = 4 * U
    B, C = out_ref.shape
    T = TB // B
    H2 = w1_ref.shape[1]
    H = w2_ref.shape[1]

    off_b1 = _round_up_128(2 * G)
    off_b2 = off_b1 + _round_up_128(H2)
    off_b3 = off_b2 + _round_up_128(H)

    # ---- Hoisted input projection: one (T*B, D) @ (D, 8U) matmul, biases folded in. ----
    gx = (jnp.dot(x_ref[...], wih_ref[...], preferred_element_type=jnp.float32)
          + bias_ref[:, 0:2 * G])                               # (T*B, 8U)

    whh = whh_ref[...]

    def gate_act(gates):                                        # PyTorch order i, f, g, o
        i = jax.nn.sigmoid(gates[:, 0 * U:1 * U])
        f = jax.nn.sigmoid(gates[:, 1 * U:2 * U])
        g = jnp.tanh(gates[:, 2 * U:3 * U])
        o = jax.nn.sigmoid(gates[:, 3 * U:4 * U])
        return i, f, g, o

    # ---- Forward recurrence: only h @ W_hh remains on the serial critical path. ----
    # Time step t is the statically aligned row block [t*B : (t+1)*B] of gx.
    # TODO(synk): for large T switch to lax.fori_loop (unroll=False) or a grid axis to
    #             bound live ranges; full unroll is fine for small static T.
    h = jnp.zeros((B, U), jnp.float32)
    c = jnp.zeros((B, U), jnp.float32)
    for t in range(T):
        gates = gx[t * B:(t + 1) * B, 0:G] + jnp.dot(
            h, whh, preferred_element_type=jnp.float32)
        i, f, g, o = gate_act(gates)
        c = f * c + i * g
        h = o * jnp.tanh(c)

    # ---- Backward direction: lstm_out[:, -1, :] of the reverse half is ONE step from
    #      zero state on x[:, T-1, :]; h0 == c0 == 0, so no recurrent matmul is needed
    #      and c_new = i * g. ----
    ib, _fb, gb, ob = gate_act(gx[(T - 1) * B:T * B, G:2 * G])
    h_bwd = ob * jnp.tanh(ib * gb)

    last = jnp.concatenate([h, h_bwd], axis=-1)                 # (B, 2U)

    def leaky_relu(v):
        return jnp.where(v >= 0, v, 0.01 * v)

    # dense1 -> leaky_relu   (bn1 folded into dense2; dropout1 is identity in eval mode)
    y = leaky_relu(jnp.dot(last, w1_ref[...], preferred_element_type=jnp.float32)
                   + bias_ref[:, off_b1:off_b1 + H2])
    # dense2 (bn1 folded) -> leaky_relu   (bn2 folded into output layer; dropout2 identity)
    y = leaky_relu(jnp.dot(y, w2_ref[...], preferred_element_type=jnp.float32)
                   + bias_ref[:, off_b2:off_b2 + H])
    # output layer (bn2 folded)
    out_ref[...] = (jnp.dot(y, w3_ref[...], preferred_element_type=jnp.float32)
                    + bias_ref[:, off_b3:off_b3 + C])


def pack_params(params):
    """One-time, mathematically exact parameter transform:
    - concat fwd/bwd LSTM input weights -> one (D, 8U) matrix,
    - fold eval-mode BatchNorm affines into the next Linear,
    - pack all biases into a single 128-lane-aligned row vector."""
    U = params["whh_f"].shape[0]
    G = 4 * U
    w1 = params["w1"]
    H2 = w1.shape[1]
    # bn1 folded into dense2:  (s1*y + t1) @ w2 + b2 == y @ (s1^T * w2) + (t1 @ w2 + b2)
    w2 = params["s1"].reshape(-1, 1) * params["w2"]
    b2 = params["b2"] + params["t1"] @ params["w2"]
    H = w2.shape[1]
    # bn2 folded into the output layer.
    w3 = params["s2"].reshape(-1, 1) * params["w3"]
    b3 = params["b3"] + params["t2"] @ params["w3"]
    C = w3.shape[1]

    off_b1 = _round_up_128(2 * G)
    off_b2 = off_b1 + _round_up_128(H2)
    off_b3 = off_b2 + _round_up_128(H)
    total = off_b3 + _round_up_128(C)

    bias = jnp.zeros((1, total), jnp.float32)
    bias = bias.at[:, 0:G].set(params["b_f"])
    bias = bias.at[:, G:2 * G].set(params["b_b"])
    bias = bias.at[:, off_b1:off_b1 + H2].set(params["b1"])
    bias = bias.at[:, off_b2:off_b2 + H].set(b2)
    bias = bias.at[:, off_b3:off_b3 + C].set(b3)

    return {
        "wih": jnp.concatenate([params["wih_f"], params["wih_b"]], axis=1),  # (D, 8U)
        "whh": params["whh_f"],                                              # (U, 4U)
        "w1": w1, "w2": w2, "w3": w3, "bias": bias,
    }


def expanded_pure_lstm_classifier(x_deep, packed):
    """x_deep: (B, T, D) float32 (batch-first, like PyTorch). Returns (B, C) logits."""
    B, T, D = x_deep.shape
    C = packed["w3"].shape[1]
    # Time-major + flatten so the kernel can run ONE big input-projection matmul and
    # fetch time step t as the row block [t*B:(t+1)*B] with static, 8-aligned offsets.
    x2d = jnp.transpose(x_deep, (1, 0, 2)).reshape(T * B, D)

    vmem = pl.BlockSpec(memory_space=pltpu.MemorySpace.VMEM)
    return pl.pallas_call(
        _lstm_mlp_kernel,
        out_shape=jax.ShapeDtypeStruct((B, C), jnp.float32),
        in_specs=[vmem] * 7,
        out_specs=vmem,
    )(x2d, packed["wih"], packed["whh"], packed["w1"],
      packed["w2"], packed["w3"], packed["bias"])


def init_params(key, deep_features, hidden_size=64, lstm_units=48, num_classes=3):
    """Raw, PyTorch-equivalent parameters (weights pre-transposed for x @ W layout)."""
    D, U, H, C = deep_features, lstm_units, hidden_size, num_classes
    ks = jax.random.split(key, 16)

    def rnd(k, shape, scale=0.1):
        return (scale * jax.random.normal(k, shape)).astype(jnp.float32)

    eps = 1e-5
    # BatchNorm1d eval with default running stats (mean=0, var=1):
    #   y = gamma * x / sqrt(1 + eps) + beta  -> (scale, shift)
    g1, be1 = rnd(ks[10], (1, 2 * H), 1.0), rnd(ks[11], (1, 2 * H))
    g2, be2 = rnd(ks[12], (1, H), 1.0), rnd(ks[13], (1, H))
    return {
        # LSTM weights transposed: (D, 4U) / (U, 4U); bias = b_ih + b_hh -> (1, 4U)
        "wih_f": rnd(ks[0], (D, 4 * U)), "whh_f": rnd(ks[1], (U, 4 * U)),
        "b_f": rnd(ks[2], (1, 4 * U)),
        "wih_b": rnd(ks[3], (D, 4 * U)), "whh_b": rnd(ks[4], (U, 4 * U)),
        "b_b": rnd(ks[5], (1, 4 * U)),
        "w1": rnd(ks[6], (2 * U, 2 * H)), "b1": rnd(ks[7], (1, 2 * H)),
        "s1": g1 / jnp.sqrt(1.0 + eps), "t1": be1,
        "w2": rnd(ks[8], (2 * H, H)), "b2": rnd(ks[9], (1, H)),
        "s2": g2 / jnp.sqrt(1.0 + eps), "t2": be2,
        "w3": rnd(ks[14], (H, C)), "b3": rnd(ks[15], (1, C)),
    }


def reference_forward(x_deep, params):
    """Plain-JAX reference mirroring the PyTorch eval-mode forward (unfused), for validation."""
    B, T, D = x_deep.shape
    U = params["whh_f"].shape[0]

    def cell(x_t, h, c, wih, whh, b):
        gates = x_t @ wih + h @ whh + b
        i = jax.nn.sigmoid(gates[:, :U])
        f = jax.nn.sigmoid(gates[:, U:2 * U])
        g = jnp.tanh(gates[:, 2 * U:3 * U])
        o = jax.nn.sigmoid(gates[:, 3 * U:])
        c = f * c + i * g
        return o * jnp.tanh(c), c

    h = jnp.zeros((B, U), jnp.float32)
    c = jnp.zeros((B, U), jnp.float32)
    for t in range(T):
        h, c = cell(x_deep[:, t, :], h, c, params["wih_f"], params["whh_f"], params["b_f"])
    hb, _ = cell(x_deep[:, T - 1, :], jnp.zeros((B, U)), jnp.zeros((B, U)),
                 params["wih_b"], params["whh_b"], params["b_b"])
    last = jnp.concatenate([h, hb], axis=-1)

    lrelu = lambda v: jnp.where(v >= 0, v, 0.01 * v)
    y = lrelu(last @ params["w1"] + params["b1"]) * params["s1"] + params["t1"]
    y = lrelu(y @ params["w2"] + params["b2"]) * params["s2"] + params["t2"]
    return y @ params["w3"] + params["b3"]


if __name__ == "__main__":
    # (8,128)-tile-friendly small shapes: B multiple of 8 (full sublanes),
    # lstm_units = 32 so the gate row 4U = 128 is an exact lane tile.
    B, T, D = 8, 8, 16            # batch, time_steps, deep_features
    hidden_size, lstm_units, num_classes = 32, 32, 3

    key = jax.random.PRNGKey(0)
    k_x, k_p = jax.random.split(key)
    x_deep = jax.random.normal(k_x, (B, T, D), dtype=jnp.float32)
    params = init_params(k_p, D, hidden_size=hidden_size,
                         lstm_units=lstm_units, num_classes=num_classes)
    packed = pack_params(params)

    logits = jax.block_until_ready(expanded_pure_lstm_classifier(x_deep, packed))
    assert logits.shape == (B, num_classes)

    ref = reference_forward(x_deep, params)
    assert jnp.allclose(logits, ref, atol=1e-4, rtol=1e-4), "Pallas kernel mismatch vs reference"

    print("KERNEL_OK")
</pallas_src>

<mosaic_0001>
module attributes {stable_mosaic.version = 11 : i64} {
  func.func @_lstm_mlp_kernel(%arg0: memref<64x16xf32, #tpu.memory_space<vmem>>, %arg1: memref<16x256xf32, #tpu.memory_space<vmem>>, %arg2: memref<32x128xf32, #tpu.memory_space<vmem>>, %arg3: memref<64x64xf32, #tpu.memory_space<vmem>>, %arg4: memref<64x32xf32, #tpu.memory_space<vmem>>, %arg5: memref<32x3xf32, #tpu.memory_space<vmem>>, %arg6: memref<1x640xf32, #tpu.memory_space<vmem>>, %arg7: memref<8x3xf32, #tpu.memory_space<vmem>>) attributes {dimension_semantics = [], scalar_prefetch = 0 : i64, scratch_operands = 0 : i64, tpu.core_type = #tpu.core_type<tc>} {
    %c0 = arith.constant 0 : index
    %c0_0 = arith.constant 0 : index
    %0 = vector.load %arg0[%c0, %c0_0] : memref<64x16xf32, #tpu.memory_space<vmem>>, vector<64x16xf32>
    %c0_1 = arith.constant 0 : index
    %c0_2 = arith.constant 0 : index
    %1 = vector.load %arg1[%c0_1, %c0_2] : memref<16x256xf32, #tpu.memory_space<vmem>>, vector<16x256xf32>
    %cst = arith.constant dense<0.000000e+00> : vector<64x256xf32>
    %2 = tpu.matmul %0, %1, %cst {dimension_numbers = #tpu.dot_dimension_numbers<[1], [0], [0], [1], [0, 0, 1, 1], [], []>} : vector<64x16xf32>, vector<16x256xf32>, vector<64x256xf32> -> vector<64x256xf32>
    %c0_3 = arith.constant 0 : index
    %c0_4 = arith.constant 0 : index
    %3 = vector.load %arg6[%c0_3, %c0_4] : memref<1x640xf32, #tpu.memory_space<vmem>>, vector<1x256xf32>
    %4 = vector.broadcast %3 : vector<1x256xf32> to vector<64x256xf32>
    %5 = arith.addf %2, %4 : vector<64x256xf32>
    %c0_5 = arith.constant 0 : index
    %c0_6 = arith.constant 0 : index
    %6 = vector.load %arg2[%c0_5, %c0_6] : memref<32x128xf32, #tpu.memory_space<vmem>>, vector<32x128xf32>
    %cst_7 = arith.constant 0.000000e+00 : f32
    %7 = vector.broadcast %cst_7 : f32 to vector<8x32xf32>
    %cst_8 = arith.constant 0.000000e+00 : f32
    %8 = vector.broadcast %cst_8 : f32 to vector<8x32xf32>
    %9 = vector.extract_strided_slice %5 {offsets = [0, 0], sizes = [8, 128], strides = [1, 1]} : vector<64x256xf32> to vector<8x128xf32>
    %cst_9 = arith.constant dense<0.000000e+00> : vector<8x128xf32>
    %10 = tpu.matmul %7, %6, %cst_9 {dimension_numbers = #tpu.dot_dimension_numbers<[1], [0], [0], [1], [0, 0, 1, 1], [], []>} : vector<8x32xf32>, vector<32x128xf32>, vector<8x128xf32> -> vector<8x128xf32>
    %11 = arith.addf %9, %10 : vector<8x128xf32>
    %12 = vector.extract_strided_slice %11 {offsets = [0, 0], sizes = [8, 32], strides = [1, 1]} : vector<8x128xf32> to vector<8x32xf32>
    %13 = arith.negf %12 : vector<8x32xf32>
    %14 = math.exp %13 : vector<8x32xf32>
    %cst_10 = arith.constant 1.000000e+00 : f32
    %15 = vector.broadcast %cst_10 : f32 to vector<8x32xf32>
    %16 = arith.addf %15, %14 : vector<8x32xf32>
    %17 = arith.divf %15, %16 : vector<8x32xf32>
    %18 = vector.extract_strided_slice %11 {offsets = [0, 32], sizes = [8, 32], strides = [1, 1]} : vector<8x128xf32> to vector<8x32xf32>
    %19 = arith.negf %18 : vector<8x32xf32>
    %20 = math.exp %19 : vector<8x32xf32>
    %cst_11 = arith.constant 1.000000e+00 : f32
    %21 = vector.broadcast %cst_11 : f32 to vector<8x32xf32>
    %22 = arith.addf %21, %20 : vector<8x32xf32>
    %23 = arith.divf %21, %22 : vector<8x32xf32>
    %24 = vector.extract_strided_slice %11 {offsets = [0, 64], sizes = [8, 32], strides = [1, 1]} : vector<8x128xf32> to vector<8x32xf32>
    %25 = math.tanh %24 : vector<8x32xf32>
    %26 = vector.extract_strided_slice %11 {offsets = [0, 96], sizes = [8, 32], strides = [1, 1]} : vector<8x128xf32> to vector<8x32xf32>
    %27 = arith.negf %26 : vector<8x32xf32>
    %28 = math.exp %27 : vector<8x32xf32>
    %cst_12 = arith.constant 1.000000e+00 : f32
    %29 = vector.broadcast %cst_12 : f32 to vector<8x32xf32>
    %30 = arith.addf %29, %28 : vector<8x32xf32>
    %31 = arith.divf %29, %30 : vector<8x32xf32>
    %32 = arith.mulf %23, %8 : vector<8x32xf32>
    %33 = arith.mulf %17, %25 : vector<8x32xf32>
    %34 = arith.addf %32, %33 : vector<8x32xf32>
    %35 = math.tanh %34 : vector<8x32xf32>
    %36 = arith.mulf %31, %35 : vector<8x32xf32>
    %37 = vector.extract_strided_slice %5 {offsets = [8, 0], sizes = [8, 128], strides = [1, 1]} : vector<64x256xf32> to vector<8x128xf32>
    %cst_13 = arith.constant dense<0.000000e+00> : vector<8x128xf32>
    %38 = tpu.matmul %36, %6, %cst_13 {dimension_numbers = #tpu.dot_dimension_numbers<[1], [0], [0], [1], [0, 0, 1, 1], [], []>} : vector<8x32xf32>, vector<32x128xf32>, vector<8x128xf32> -> vector<8x128xf32>
    %39 = arith.addf %37, %38 : vector<8x128xf32>
    %40 = vector.extract_strided_slice %39 {offsets = [0, 0], sizes = [8, 32], strides = [1, 1]} : vector<8x128xf32> to vector<8x32xf32>
    %41 = arith.negf %40 : vector<8x32xf32>
    %42 = math.exp %41 : vector<8x32xf32>
    %cst_14 = arith.constant 1.000000e+00 : f32
    %43 = vector.broadcast %cst_14 : f32 to vector<8x32xf32>
    %44 = arith.addf %43, %42 : vector<8x32xf32>
    %45 = arith.divf %43, %44 : vector<8x32xf32>
    %46 = vector.extract_strided_slice %39 {offsets = [0, 32], sizes = [8, 32], strides = [1, 1]} : vector<8x128xf32> to vector<8x32xf32>
    %47 = arith.negf %46 : vector<8x32xf32>
    %48 = math.exp %47 : vector<8x32xf32>
    %cst_15 = arith.constant 1.000000e+00 : f32
    %49 = vector.broadcast %cst_15 : f32 to vector<8x32xf32>
    %50 = arith.addf %49, %48 : vector<8x32xf32>
    %51 = arith.divf %49, %50 : vector<8x32xf32>
    %52 = vector.extract_strided_slice %39 {offsets = [0, 64], sizes = [8, 32], strides = [1, 1]} : vector<8x128xf32> to vector<8x32xf32>
    %53 = math.tanh %52 : vector<8x32xf32>
    %54 = vector.extract_strided_slice %39 {offsets = [0, 96], sizes = [8, 32], strides = [1, 1]} : vector<8x128xf32> to vector<8x32xf32>
    %55 = arith.negf %54 : vector<8x32xf32>
    %56 = math.exp %55 : vector<8x32xf32>
    %cst_16 = arith.constant 1.000000e+00 : f32
    %57 = vector.broadcast %cst_16 : f32 to vector<8x32xf32>
    %58 = arith.addf %57, %56 : vector<8x32xf32>
    %59 = arith.divf %57, %58 : vector<8x32xf32>
    %60 = arith.mulf %51, %34 : vector<8x32xf32>
    %61 = arith.mulf %45, %53 : vector<8x32xf32>
    %62 = arith.addf %60, %61 : vector<8x32xf32>
    %63 = math.tanh %62 : vector<8x32xf32>
    %64 = arith.mulf %59, %63 : vector<8x32xf32>
    %65 = vector.extract_strided_slice %5 {offsets = [16, 0], sizes = [8, 128], strides = [1, 1]} : vector<64x256xf32> to vector<8x128xf32>
    %cst_17 = arith.constant dense<0.000000e+00> : vector<8x128xf32>
    %66 = tpu.matmul %64, %6, %cst_17 {dimension_numbers = #tpu.dot_dimension_numbers<[1], [0], [0], [1], [0, 0, 1, 1], [], []>} : vector<8x32xf32>, vector<32x128xf32>, vector<8x128xf32> -> vector<8x128xf32>
    %67 = arith.addf %65, %66 : vector<8x128xf32>
    %68 = vector.extract_strided_slice %67 {offsets = [0, 0], sizes = [8, 32], strides = [1, 1]} : vector<8x128xf32> to vector<8x32xf32>
    %69 = arith.negf %68 : vector<8x32xf32>
    %70 = math.exp %69 : vector<8x32xf32>
    %cst_18 = arith.constant 1.000000e+00 : f32
    %71 = vector.broadcast %cst_18 : f32 to vector<8x32xf32>
    %72 = arith.addf %71, %70 : vector<8x32xf32>
    %73 = arith.divf %71, %72 : vector<8x32xf32>
    %74 = vector.extract_strided_slice %67 {offsets = [0, 32], sizes = [8, 32], strides = [1, 1]} : vector<8x128xf32> to vector<8x32xf32>
    %75 = arith.negf %74 : vector<8x32xf32>
    %76 = math.exp %75 : vector<8x32xf32>
    %cst_19 = arith.constant 1.000000e+00 : f32
    %77 = vector.broadcast %cst_19 : f32 to vector<8x32xf32>
    %78 = arith.addf %77, %76 : vector<8x32xf32>
    %79 = arith.divf %77, %78 : vector<8x32xf32>
    %80 = vector.extract_strided_slice %67 {offsets = [0, 64], sizes = [8, 32], strides = [1, 1]} : vector<8x128xf32> to vector<8x32xf32>
    %81 = math.tanh %80 : vector<8x32xf32>
    %82 = vector.extract_strided_slice %67 {offsets = [0, 96], sizes = [8, 32], strides = [1, 1]} : vector<8x128xf32> to vector<8x32xf32>
    %83 = arith.negf %82 : vector<8x32xf32>
    %84 = math.exp %83 : vector<8x32xf32>
    %cst_20 = arith.constant 1.000000e+00 : f32
    %85 = vector.broadcast %cst_20 : f32 to vector<8x32xf32>
    %86 = arith.addf %85, %84 : vector<8x32xf32>
    %87 = arith.divf %85, %86 : vector<8x32xf32>
    %88 = arith.mulf %79, %62 : vector<8x32xf32>
    %89 = arith.mulf %73, %81 : vector<8x32xf32>
    %90 = arith.addf %88, %89 : vector<8x32xf32>
    %91 = math.tanh %90 : vector<8x32xf32>
    %92 = arith.mulf %87, %91 : vector<8x32xf32>
    %93 = vector.extract_strided_slice %5 {offsets = [24, 0], sizes = [8, 128], strides = [1, 1]} : vector<64x256xf32> to vector<8x128xf32>
    %cst_21 = arith.constant dense<0.000000e+00> : vector<8x128xf32>
    %94 = tpu.matmul %92, %6, %cst_21 {dimension_numbers = #tpu.dot_dimension_numbers<[1], [0], [0], [1], [0, 0, 1, 1], [], []>} : vector<8x32xf32>, vector<32x128xf32>, vector<8x128xf32> -> vector<8x128xf32>
    %95 = arith.addf %93, %94 : vector<8x128xf32>
    %96 = vector.extract_strided_slice %95 {offsets = [0, 0], sizes = [8, 32], strides = [1, 1]} : vector<8x128xf32> to vector<8x32xf32>
    %97 = arith.negf %96 : vector<8x32xf32>
    %98 = math.exp %97 : vector<8x32xf32>
    %cst_22 = arith.constant 1.000000e+00 : f32
    %99 = vector.broadcast %cst_22 : f32 to vector<8x32xf32>
    %100 = arith.addf %99, %98 : vector<8x32xf32>
    %101 = arith.divf %99, %100 : vector<8x32xf32>
    %102 = vector.extract_strided_slice %95 {offsets = [0, 32], sizes = [8, 32], strides = [1, 1]} : vector<8x128xf32> to vector<8x32xf32>
    %103 = arith.negf %102 : vector<8x32xf32>
    %104 = math.exp %103 : vector<8x32xf32>
    %cst_23 = arith.constant 1.000000e+00 : f32
    %105 = vector.broadcast %cst_23 : f32 to vector<8x32xf32>
    %106 = arith.addf %105, %104 : vector<8x32xf32>
    %107 = arith.divf %105, %106 : vector<8x32xf32>
    %108 = vector.extract_strided_slice %95 {offsets = [0, 64], sizes = [8, 32], strides = [1, 1]} : vector<8x128xf32> to vector<8x32xf32>
    %109 = math.tanh %108 : vector<8x32xf32>
    %110 = vector.extract_strided_slice %95 {offsets = [0, 96], sizes = [8, 32], strides = [1, 1]} : vector<8x128xf32> to vector<8x32xf32>
    %111 = arith.negf %110 : vector<8x32xf32>
    %112 = math.exp %111 : vector<8x32xf32>
    %cst_24 = arith.constant 1.000000e+00 : f32
    %113 = vector.broadcast %cst_24 : f32 to vector<8x32xf32>
    %114 = arith.addf %113, %112 : vector<8x32xf32>
    %115 = arith.divf %113, %114 : vector<8x32xf32>
    %116 = arith.mulf %107, %90 : vector<8x32xf32>
    %117 = arith.mulf %101, %109 : vector<8x32xf32>
    %118 = arith.addf %116, %117 : vector<8x32xf32>
    %119 = math.tanh %118 : vector<8x32xf32>
    %120 = arith.mulf %115, %119 : vector<8x32xf32>
    %121 = vector.extract_strided_slice %5 {offsets = [32, 0], sizes = [8, 128], strides = [1, 1]} : vector<64x256xf32> to vector<8x128xf32>
    %cst_25 = arith.constant dense<0.000000e+00> : vector<8x128xf32>
    %122 = tpu.matmul %120, %6, %cst_25 {dimension_numbers = #tpu.dot_dimension_numbers<[1], [0], [0], [1], [0, 0, 1, 1], [], []>} : vector<8x32xf32>, vector<32x128xf32>, vector<8x128xf32> -> vector<8x128xf32>
    %123 = arith.addf %121, %122 : vector<8x128xf32>
    %124 = vector.extract_strided_slice %123 {offsets = [0, 0], sizes = [8, 32], strides = [1, 1]} : vector<8x128xf32> to vector<8x32xf32>
    %125 = arith.negf %124 : vector<8x32xf32>
    %126 = math.exp %125 : vector<8x32xf32>
    %cst_26 = arith.constant 1.000000e+00 : f32
    %127 = vector.broadcast %cst_26 : f32 to vector<8x32xf32>
    %128 = arith.addf %127, %126 : vector<8x32xf32>
    %129 = arith.divf %127, %128 : vector<8x32xf32>
    %130 = vector.extract_strided_slice %123 {offsets = [0, 32], sizes = [8, 32], strides = [1, 1]} : vector<8x128xf32> to vector<8x32xf32>
    %131 = arith.negf %130 : vector<8x32xf32>
    %132 = math.exp %131 : vector<8x32xf32>
    %cst_27 = arith.constant 1.000000e+00 : f32
    %133 = vector.broadcast %cst_27 : f32 to vector<8x32xf32>
    %134 = arith.addf %133, %132 : vector<8x32xf32>
    %135 = arith.divf %133, %134 : vector<8x32xf32>
    %136 = vector.extract_strided_slice %123 {offsets = [0, 64], sizes = [8, 32], strides = [1, 1]} : vector<8x128xf32> to vector<8x32xf32>
    %137 = math.tanh %136 : vector<8x32xf32>
    %138 = vector.extract_strided_slice %123 {offsets = [0, 96], sizes = [8, 32], strides = [1, 1]} : vector<8x128xf32> to vector<8x32xf32>
    %139 = arith.negf %138 : vector<8x32xf32>
    %140 = math.exp %139 : vector<8x32xf32>
    %cst_28 = arith.constant 1.000000e+00 : f32
    %141 = vector.broadcast %cst_28 : f32 to vector<8x32xf32>
    %142 = arith.addf %141, %140 : vector<8x32xf32>
    %143 = arith.divf %141, %142 : vector<8x32xf32>
    %144 = arith.mulf %135, %118 : vector<8x32xf32>
    %145 = arith.mulf %129, %137 : vector<8x32xf32>
    %146 = arith.addf %144, %145 : vector<8x32xf32>
    %147 = math.tanh %146 : vector<8x32xf32>
    %148 = arith.mulf %143, %147 : vector<8x32xf32>
    %149 = vector.extract_strided_slice %5 {offsets = [40, 0], sizes = [8, 128], strides = [1, 1]} : vector<64x256xf32> to vector<8x128xf32>
    %cst_29 = arith.constant dense<0.000000e+00> : vector<8x128xf32>
    %150 = tpu.matmul %148, %6, %cst_29 {dimension_numbers = #tpu.dot_dimension_numbers<[1], [0], [0], [1], [0, 0, 1, 1], [], []>} : vector<8x32xf32>, vector<32x128xf32>, vector<8x128xf32> -> vector<8x128xf32>
    %151 = arith.addf %149, %150 : vector<8x128xf32>
    %152 = vector.extract_strided_slice %151 {offsets = [0, 0], sizes = [8, 32], strides = [1, 1]} : vector<8x128xf32> to vector<8x32xf32>
    %153 = arith.negf %152 : vector<8x32xf32>
    %154 = math.exp %153 : vector<8x32xf32>
    %cst_30 = arith.constant 1.000000e+00 : f32
    %155 = vector.broadcast %cst_30 : f32 to vector<8x32xf32>
    %156 = arith.addf %155, %154 : vector<8x32xf32>
    %157 = arith.divf %155, %156 : vector<8x32xf32>
    %158 = vector.extract_strided_slice %151 {offsets = [0, 32], sizes = [8, 32], strides = [1, 1]} : vector<8x128xf32> to vector<8x32xf32>
    %159 = arith.negf %158 : vector<8x32xf32>
    %160 = math.exp %159 : vector<8x32xf32>
    %cst_31 = arith.constant 1.000000e+00 : f32
    %161 = vector.broadcast %cst_31 : f32 to vector<8x32xf32>
    %162 = arith.addf %161, %160 : vector<8x32xf32>
    %163 = arith.divf %161, %162 : vector<8x32xf32>
    %164 = vector.extract_strided_slice %151 {offsets = [0, 64], sizes = [8, 32], strides = [1, 1]} : vector<8x128xf32> to vector<8x32xf32>
    %165 = math.tanh %164 : vector<8x32xf32>
    %166 = vector.extract_strided_slice %151 {offsets = [0, 96], sizes = [8, 32], strides = [1, 1]} : vector<8x128xf32> to vector<8x32xf32>
    %167 = arith.negf %166 : vector<8x32xf32>
    %168 = math.exp %167 : vector<8x32xf32>
    %cst_32 = arith.constant 1.000000e+00 : f32
    %169 = vector.broadcast %cst_32 : f32 to vector<8x32xf32>
    %170 = arith.addf %169, %168 : vector<8x32xf32>
    %171 = arith.divf %169, %170 : vector<8x32xf32>
    %172 = arith.mulf %163, %146 : vector<8x32xf32>
    %173 = arith.mulf %157, %165 : vector<8x32xf32>
    %174 = arith.addf %172, %173 : vector<8x32xf32>
    %175 = math.tanh %174 : vector<8x32xf32>
    %176 = arith.mulf %171, %175 : vector<8x32xf32>
    %177 = vector.extract_strided_slice %5 {offsets = [48, 0], sizes = [8, 128], strides = [1, 1]} : vector<64x256xf32> to vector<8x128xf32>
    %cst_33 = arith.constant dense<0.000000e+00> : vector<8x128xf32>
    %178 = tpu.matmul %176, %6, %cst_33 {dimension_numbers = #tpu.dot_dimension_numbers<[1], [0], [0], [1], [0, 0, 1, 1], [], []>} : vector<8x32xf32>, vector<32x128xf32>, vector<8x128xf32> -> vector<8x128xf32>
    %179 = arith.addf %177, %178 : vector<8x128xf32>
    %180 = vector.extract_strided_slice %179 {offsets = [0, 0], sizes = [8, 32], strides = [1, 1]} : vector<8x128xf32> to vector<8x32xf32>
    %181 = arith.negf %180 : vector<8x32xf32>
    %182 = math.exp %181 : vector<8x32xf32>
    %cst_34 = arith.constant 1.000000e+00 : f32
    %183 = vector.broadcast %cst_34 : f32 to vector<8x32xf32>
    %184 = arith.addf %183, %182 : vector<8x32xf32>
    %185 = arith.divf %183, %184 : vector<8x32xf32>
    %186 = vector.extract_strided_slice %179 {offsets = [0, 32], sizes = [8, 32], strides = [1, 1]} : vector<8x128xf32> to vector<8x32xf32>
    %187 = arith.negf %186 : vector<8x32xf32>
    %188 = math.exp %187 : vector<8x32xf32>
    %cst_35 = arith.constant 1.000000e+00 : f32
    %189 = vector.broadcast %cst_35 : f32 to vector<8x32xf32>
    %190 = arith.addf %189, %188 : vector<8x32xf32>
    %191 = arith.divf %189, %190 : vector<8x32xf32>
    %192 = vector.extract_strided_slice %179 {offsets = [0, 64], sizes = [8, 32], strides = [1, 1]} : vector<8x128xf32> to vector<8x32xf32>
    %193 = math.tanh %192 : vector<8x32xf32>
    %194 = vector.extract_strided_slice %179 {offsets = [0, 96], sizes = [8, 32], strides = [1, 1]} : vector<8x128xf32> to vector<8x32xf32>
    %195 = arith.negf %194 : vector<8x32xf32>
    %196 = math.exp %195 : vector<8x32xf32>
    %cst_36 = arith.constant 1.000000e+00 : f32
    %197 = vector.broadcast %cst_36 : f32 to vector<8x32xf32>
    %198 = arith.addf %197, %196 : vector<8x32xf32>
    %199 = arith.divf %197, %198 : vector<8x32xf32>
    %200 = arith.mulf %191, %174 : vector<8x32xf32>
    %201 = arith.mulf %185, %193 : vector<8x32xf32>
    %202 = arith.addf %200, %201 : vector<8x32xf32>
    %203 = math.tanh %202 : vector<8x32xf32>
    %204 = arith.mulf %199, %203 : vector<8x32xf32>
    %205 = vector.extract_strided_slice %5 {offsets = [56, 0], sizes = [8, 128], strides = [1, 1]} : vector<64x256xf32> to vector<8x128xf32>
    %cst_37 = arith.constant dense<0.000000e+00> : vector<8x128xf32>
    %206 = tpu.matmul %204, %6, %cst_37 {dimension_numbers = #tpu.dot_dimension_numbers<[1], [0], [0], [1], [0, 0, 1, 1], [], []>} : vector<8x32xf32>, vector<32x128xf32>, vector<8x128xf32> -> vector<8x128xf32>
    %207 = arith.addf %205, %206 : vector<8x128xf32>
    %208 = vector.extract_strided_slice %207 {offsets = [0, 0], sizes = [8, 32], strides = [1, 1]} : vector<8x128xf32> to vector<8x32xf32>
    %209 = arith.negf %208 : vector<8x32xf32>
    %210 = math.exp %209 : vector<8x32xf32>
    %cst_38 = arith.constant 1.000000e+00 : f32
    %211 = vector.broadcast %cst_38 : f32 to vector<8x32xf32>
    %212 = arith.addf %211, %210 : vector<8x32xf32>
    %213 = arith.divf %211, %212 : vector<8x32xf32>
    %214 = vector.extract_strided_slice %207 {offsets = [0, 32], sizes = [8, 32], strides = [1, 1]} : vector<8x128xf32> to vector<8x32xf32>
    %215 = arith.negf %214 : vector<8x32xf32>
    %216 = math.exp %215 : vector<8x32xf32>
    %cst_39 = arith.constant 1.000000e+00 : f32
    %217 = vector.broadcast %cst_39 : f32 to vector<8x32xf32>
    %218 = arith.addf %217, %216 : vector<8x32xf32>
    %219 = arith.divf %217, %218 : vector<8x32xf32>
    %220 = vector.extract_strided_slice %207 {offsets = [0, 64], sizes = [8, 32], strides = [1, 1]} : vector<8x128xf32> to vector<8x32xf32>
    %221 = math.tanh %220 : vector<8x32xf32>
    %222 = vector.extract_strided_slice %207 {offsets = [0, 96], sizes = [8, 32], strides = [1, 1]} : vector<8x128xf32> to vector<8x32xf32>
    %223 = arith.negf %222 : vector<8x32xf32>
    %224 = math.exp %223 : vector<8x32xf32>
    %cst_40 = arith.constant 1.000000e+00 : f32
    %225 = vector.broadcast %cst_40 : f32 to vector<8x32xf32>
    %226 = arith.addf %225, %224 : vector<8x32xf32>
    %227 = arith.divf %225, %226 : vector<8x32xf32>
    %228 = arith.mulf %219, %202 : vector<8x32xf32>
    %229 = arith.mulf %213, %221 : vector<8x32xf32>
    %230 = arith.addf %228, %229 : vector<8x32xf32>
    %231 = math.tanh %230 : vector<8x32xf32>
    %232 = arith.mulf %227, %231 : vector<8x32xf32>
    %233 = vector.extract_strided_slice %5 {offsets = [56, 128], sizes = [8, 128], strides = [1, 1]} : vector<64x256xf32> to vector<8x128xf32>
    %234 = vector.extract_strided_slice %233 {offsets = [0, 0], sizes = [8, 32], strides = [1, 1]} : vector<8x128xf32> to vector<8x32xf32>
    %235 = arith.negf %234 : vector<8x32xf32>
    %236 = math.exp %235 : vector<8x32xf32>
    %cst_41 = arith.constant 1.000000e+00 : f32
    %237 = vector.broadcast %cst_41 : f32 to vector<8x32xf32>
    %238 = arith.addf %237, %236 : vector<8x32xf32>
    %239 = arith.divf %237, %238 : vector<8x32xf32>
    %240 = vector.extract_strided_slice %233 {offsets = [0, 64], sizes = [8, 32], strides = [1, 1]} : vector<8x128xf32> to vector<8x32xf32>
    %241 = math.tanh %240 : vector<8x32xf32>
    %242 = vector.extract_strided_slice %233 {offsets = [0, 96], sizes = [8, 32], strides = [1, 1]} : vector<8x128xf32> to vector<8x32xf32>
    %243 = arith.negf %242 : vector<8x32xf32>
    %244 = math.exp %243 : vector<8x32xf32>
    %cst_42 = arith.constant 1.000000e+00 : f32
    %245 = vector.broadcast %cst_42 : f32 to vector<8x32xf32>
    %246 = arith.addf %245, %244 : vector<8x32xf32>
    %247 = arith.divf %245, %246 : vector<8x32xf32>
    %248 = arith.mulf %239, %241 : vector<8x32xf32>
    %249 = math.tanh %248 : vector<8x32xf32>
    %250 = arith.mulf %247, %249 : vector<8x32xf32>
    %251 = tpu.concatenate %232, %250 in 1 : vector<8x32xf32>, vector<8x32xf32> -> vector<8x64xf32>
    %c0_43 = arith.constant 0 : index
    %c0_44 = arith.constant 0 : index
    %252 = vector.load %arg3[%c0_43, %c0_44] : memref<64x64xf32, #tpu.memory_space<vmem>>, vector<64x64xf32>
    %cst_45 = arith.constant dense<0.000000e+00> : vector<8x64xf32>
    %253 = tpu.matmul %251, %252, %cst_45 {dimension_numbers = #tpu.dot_dimension_numbers<[1], [0], [0], [1], [0, 0, 1, 1], [], []>} : vector<8x64xf32>, vector<64x64xf32>, vector<8x64xf32> -> vector<8x64xf32>
    %c0_46 = arith.constant 0 : index
    %c256 = arith.constant 256 : index
    %254 = vector.load %arg6[%c0_46, %c256] : memref<1x640xf32, #tpu.memory_space<vmem>>, vector<1x64xf32>
    %255 = vector.broadcast %254 : vector<1x64xf32> to vector<8x64xf32>
    %256 = arith.addf %253, %255 : vector<8x64xf32>
    %cst_47 = arith.constant 0.000000e+00 : f32
    %257 = vector.broadcast %cst_47 : f32 to vector<8x64xf32>
    %258 = arith.cmpf oge, %256, %257 : vector<8x64xf32>
    %cst_48 = arith.constant 0.00999999977 : f32
    %259 = vector.broadcast %cst_48 : f32 to vector<8x64xf32>
    %260 = arith.mulf %259, %256 : vector<8x64xf32>
    %261 = arith.select %258, %256, %260 : vector<8x64xi1>, vector<8x64xf32>
    %c0_49 = arith.constant 0 : index
    %c0_50 = arith.constant 0 : index
    %262 = vector.load %arg4[%c0_49, %c0_50] : memref<64x32xf32, #tpu.memory_space<vmem>>, vector<64x32xf32>
    %cst_51 = arith.constant dense<0.000000e+00> : vector<8x32xf32>
    %263 = tpu.matmul %261, %262, %cst_51 {dimension_numbers = #tpu.dot_dimension_numbers<[1], [0], [0], [1], [0, 0, 1, 1], [], []>} : vector<8x64xf32>, vector<64x32xf32>, vector<8x32xf32> -> vector<8x32xf32>
    %c0_52 = arith.constant 0 : index
    %c384 = arith.constant 384 : index
    %264 = vector.load %arg6[%c0_52, %c384] : memref<1x640xf32, #tpu.memory_space<vmem>>, vector<1x32xf32>
    %265 = vector.broadcast %264 : vector<1x32xf32> to vector<8x32xf32>
    %266 = arith.addf %263, %265 : vector<8x32xf32>
    %cst_53 = arith.constant 0.000000e+00 : f32
    %267 = vector.broadcast %cst_53 : f32 to vector<8x32xf32>
    %268 = arith.cmpf oge, %266, %267 : vector<8x32xf32>
    %cst_54 = arith.constant 0.00999999977 : f32
    %269 = vector.broadcast %cst_54 : f32 to vector<8x32xf32>
    %270 = arith.mulf %269, %266 : vector<8x32xf32>
    %271 = arith.select %268, %266, %270 : vector<8x32xi1>, vector<8x32xf32>
    %c0_55 = arith.constant 0 : index
    %c0_56 = arith.constant 0 : index
    %272 = vector.load %arg5[%c0_55, %c0_56] : memref<32x3xf32, #tpu.memory_space<vmem>>, vector<32x3xf32>
    %cst_57 = arith.constant dense<0.000000e+00> : vector<8x3xf32>
    %273 = tpu.matmul %271, %272, %cst_57 {dimension_numbers = #tpu.dot_dimension_numbers<[1], [0], [0], [1], [0, 0, 1, 1], [], []>} : vector<8x32xf32>, vector<32x3xf32>, vector<8x3xf32> -> vector<8x3xf32>
    %c0_58 = arith.constant 0 : index
    %c512 = arith.constant 512 : index
    %274 = vector.load %arg6[%c0_58, %c512] : memref<1x640xf32, #tpu.memory_space<vmem>>, vector<1x3xf32>
    %275 = vector.broadcast %274 : vector<1x3xf32> to vector<8x3xf32>
    %276 = arith.addf %273, %275 : vector<8x3xf32>
    %c0_59 = arith.constant 0 : index
    %c0_60 = arith.constant 0 : index
    %277 = vector.load %arg7[%c0_59, %c0_60] : memref<8x3xf32, #tpu.memory_space<vmem>>, vector<8x3xf32>
    tpu.vector_store %arg7[%c0_59, %c0_60], %276 {strides = array<i32>} : memref<8x3xf32, #tpu.memory_space<vmem>>, vector<8x3xf32>,
    return
  }
}

</mosaic_0001>

<llo_original>
// kernel: tpu_custom_call.1
$region0: #{tpu_custom_call.1}
  #allocation0 [shape = 'u32[]', space=smem, size = 0x4, offset = 0x4, fixed_abs, tag = 'smem constant byte address 0x4 - core index']
  #allocation1 [shape = 'u32[144,128]{1,0:T(1,128)}', space=vmem, size = 0x12000, scoped, tag = 'internal scratch']
  %s0 = inlined_call_operand.vmem [shape: f32[64,16], index: 0, kind: input, shape index: {}]
  %s1 = inlined_call_operand.vmem [shape: f32[16,256], index: 1, kind: input, shape index: {}]
  %s2 = inlined_call_operand.vmem [shape: f32[32,128], index: 2, kind: input, shape index: {}]
  %s3 = inlined_call_operand.vmem [shape: f32[64,64], index: 3, kind: input, shape index: {}]
  %s4 = inlined_call_operand.vmem [shape: f32[64,32], index: 4, kind: input, shape index: {}]
  %s5 = inlined_call_operand.vmem [shape: f32[32,3], index: 5, kind: input, shape index: {}]
  %s6 = inlined_call_operand.vmem [shape: f32[1,640], index: 6, kind: input, shape index: {}]
  %s7 = inlined_call_operand.vmem [shape: f32[8,3], index: 7, kind: output, shape index: {}]
  %s8 = sld [smem:[#allocation0]]
  $region38: #{tpu_custom_call.1} parent=0
    _
  %s10 = ssub.s32 1, %s8
  %s11 = scalar_select 0, %s10, %s8
  // Predicated region
  $region2: #{tpu_custom_call.1} parent=0 // pred_check
    _
  $region3: #{tpu_custom_call.1} parent=0 // pred_check_branch
    %13 = sbr.rel (0) target = $region5
  $region4: #{tpu_custom_call.1} parent=0 // pred_region
    _
  $region5: #{tpu_custom_call.1} parent=0 // pred_fallthru
    _
  // Predicated region
  $region6: #{tpu_custom_call.1} parent=0 // pred_check
    _
  $region7: #{tpu_custom_call.1} parent=0 // pred_check_branch
    %15 = sbr.rel (0) target = $region9
  $region8: #{tpu_custom_call.1} parent=0 // pred_region
    _
  $region9: #{tpu_custom_call.1} parent=0 // pred_fallthru
    _
  // Predicated region
  $region10: #{tpu_custom_call.1} parent=0 // pred_check
    _
  $region11: #{tpu_custom_call.1} parent=0 // pred_check_branch
    %17 = sbr.rel (0) target = $region13
  $region12: #{tpu_custom_call.1} parent=0 // pred_region
    _
  $region13: #{tpu_custom_call.1} parent=0 // pred_fallthru
    _
  // Predicated region
  $region14: #{tpu_custom_call.1} parent=0 // pred_check
    _
  $region15: #{tpu_custom_call.1} parent=0 // pred_check_branch
    %19 = sbr.rel (0) target = $region17
  $region16: #{tpu_custom_call.1} parent=0 // pred_region
    _
  $region17: #{tpu_custom_call.1} parent=0 // pred_fallthru
    _
  // Predicated region
  $region18: #{tpu_custom_call.1} parent=0 // pred_check
    _
  $region19: #{tpu_custom_call.1} parent=0 // pred_check_branch
    %21 = sbr.rel (0) target = $region21
  $region20: #{tpu_custom_call.1} parent=0 // pred_region
    _
  $region21: #{tpu_custom_call.1} parent=0 // pred_fallthru
    _
  // Predicated region
  $region22: #{tpu_custom_call.1} parent=0 // pred_check
    _
  $region23: #{tpu_custom_call.1} parent=0 // pred_check_branch
    %23 = sbr.rel (0) target = $region25
  $region24: #{tpu_custom_call.1} parent=0 // pred_region
    _
  $region25: #{tpu_custom_call.1} parent=0 // pred_fallthru
    _
  // Predicated region
  $region26: #{tpu_custom_call.1} parent=0 // pred_check
    _
  $region27: #{tpu_custom_call.1} parent=0 // pred_check_branch
    %25 = sbr.rel (0) target = $region29
  $region28: #{tpu_custom_call.1} parent=0 // pred_region
    _
  $region29: #{tpu_custom_call.1} parent=0 // pred_fallthru
    _
  %v26 = vld [vmem:[%s0] sm:$0xff]
  %v27 = vld [vmem:[%s0 + $0x8] sm:$0xff]
  %v28 = vld [vmem:[%s0 + $0x10] sm:$0xff]
  %v29 = vld [vmem:[%s0 + $0x18] sm:$0xff]
  %v30 = vld [vmem:[%s0 + $0x20] sm:$0xff]
  %v31 = vld [vmem:[%s0 + $0x28] sm:$0xff]
  %v32 = vld [vmem:[%s0 + $0x30] sm:$0xff]
  %v33 = vld [vmem:[%s0 + $0x38] sm:$0xff]
  %v34 = vld [vmem:[%s1] sm:$0xff]
  %v35 = vld [vmem:[%s1 + $0x8] sm:$0xff]
  %v36 = vld [vmem:[%s1 + $0x10] sm:$0xff]
  %v37 = vld [vmem:[%s1 + $0x18] sm:$0xff]
  %v38 = vld [vmem:[%s6] sm:$0x3]
  %v40 = vlaneseq
  %v41 = vshrl.u32 %v40, 7
  %v42 = vsub.s32 0, %v41
  %v43 = vrot.slane %v38, %v42
  %v44 = vlaneseq
  %v45 = vshrl.u32 %v44, 7
  %v46 = vsub.s32 1, %v45
  %v47 = vrot.slane %v38, %v46
  %vm50 = vcmask 130048
  %v52 = vsel %vm50, %v26, 0
  %v55 = vsel %vm50, %v27, 0
  %v58 = vsel %vm50, %v28, 0
  %v61 = vsel %vm50, %v29, 0
  %v64 = vsel %vm50, %v30, 0
  %v67 = vsel %vm50, %v31, 0
  %v70 = vsel %vm50, %v32, 0
  %v73 = vsel %vm50, %v33, 0
  %75 = vmatprep.subr.mxu0 %v35
  %76 = vmatpush1.msra.mxu0 %v34
  %77 = vmatprep.subr.mxu0 %v37
  %78 = vmatpush1.msra.mxu0 %v36
  %79 = vmatprep.subr.mxu0 0.0
  %80 = vmatpush1.msra.mxu0 0.0
  %81 = vmatprep.subr.mxu0 0.0
  %82 = vmatpush1.msra.mxu0 0.0
  %83 = vmatprep.subr.mxu0 0.0
  %84 = vmatpush1.msra.mxu0 0.0
  %85 = vmatprep.subr.mxu0 0.0
  %86 = vmatpush1.msra.mxu0 0.0
  %87 = vmatprep.subr.mxu0 0.0
  %88 = vmatpush1.msra.mxu0 0.0
  %89 = vmatprep.subr.mxu0 0.0
  %90 = vmatpush1.msra.mxu0 0.0
  %91 = vmatprep.subr.mxu0 0.0
  %92 = vmatpush1.msra.mxu0 0.0
  %93 = vmatprep.subr.mxu0 0.0
  %94 = vmatpush1.msra.mxu0 0.0
  %95 = vmatprep.subr.mxu0 0.0
  %96 = vmatpush1.msra.mxu0 0.0
  %97 = vmatprep.subr.mxu0 0.0
  %98 = vmatpush1.msra.mxu0 0.0
  %99 = vmatprep.subr.mxu0 0.0
  %100 = vmatpush1.msra.mxu0 0.0
  %101 = vmatprep.subr.mxu0 0.0
  %102 = vmatpush1.msra.mxu0 0.0
  %103 = vmatprep.subr.mxu0 0.0
  %104 = vmatpush1.msra.mxu0 0.0
  %105 = vmatprep.subr.mxu0 0.0
  %106 = vmatpush1.msra.mxu0 0.0
  %107 = vmatprep.subr.mxu0 0.0
  %108 = vmatpush1.msra.mxu0 0.0
  %109 = vmatprep.subr.mxu0 0.0
  %110 = vmatpush1.msra.mxu0 0.0
  %111 = vmatprep.subr.mxu0 0.0
  %112 = vmatpush1.msra.mxu0 0.0
  %113 = vmatprep.subr.mxu0 0.0
  %114 = vmatpush1.msra.mxu0 0.0
  %115 = vmatprep.subr.mxu0 0.0
  %116 = vmatpush1.msra.mxu0 0.0
  %117 = vmatprep.subr.mxu0 0.0
  %118 = vmatpush1.msra.mxu0 0.0
  %119 = vmatprep.subr.mxu0 0.0
  %120 = vmatpush1.msra.mxu0 0.0
  %121 = vmatprep.subr.mxu0 0.0
  %122 = vmatpush1.msra.mxu0 0.0
  %123 = vmatprep.subr.mxu0 0.0
  %124 = vmatpush1.msra.mxu0 0.0
  %125 = vmatprep.subr.mxu0 0.0
  %126 = vmatpush1.msra.mxu0 0.0
  %127 = vmatprep.subr.mxu0 0.0
  %128 = vmatpush1.msra.mxu0 0.0
  %129 = vmatprep.subr.mxu0 0.0
  %130 = vmatpush1.msra.mxu0 0.0
  %131 = vmatprep.subr.mxu0 0.0
  %132 = vmatpush1.msra.mxu0 0.0
  %133 = vmatprep.subr.mxu0 0.0
  %134 = vmatpush1.msra.mxu0 0.0
  %135 = vmatprep.subr.mxu0 0.0
  %136 = vmatpush1.msra.mxu0 0.0
  %137 = vmatprep.subr.mxu0 0.0
  %138 = vmatpush1.msra.mxu0 0.0
  %139 = vmatprep.mubr.f32.mxu0 0.0
  %140 = vmatmul.mubr.f32.gmra.mrb[0].mxu0 %v52
  %v141 = vpop.f32.mrb[0].mxu0
  %v142 = vadd.f32 %v43, %v141
  %v143 = vpop.f32.mrb[0].mxu0
  %144 = vmatprep.mubr.f32.mxu0 0.0
  %145 = vmatmul.mubr.f32.gmra.mrb[0].mxu0 %v55
  %v146 = vpop.f32.mrb[0].mxu0
  %v147 = vadd.f32 %v43, %v146
  %v148 = vpop.f32.mrb[0].mxu0
  %149 = vmatprep.mubr.f32.mxu0 0.0
  %150 = vmatmul.mubr.f32.gmra.mrb[0].mxu0 %v58
  %v151 = vpop.f32.mrb[0].mxu0
  %v152 = vadd.f32 %v43, %v151
  %v153 = vpop.f32.mrb[0].mxu0
  %154 = vmatprep.mubr.f32.mxu0 0.0
  %155 = vmatmul.mubr.f32.gmra.mrb[0].mxu0 %v61
  %v156 = vpop.f32.mrb[0].mxu0
  %v157 = vadd.f32 %v43, %v156
  %v158 = vpop.f32.mrb[0].mxu0
  %159 = vmatprep.mubr.f32.mxu0 0.0
  %160 = vmatmul.mubr.f32.gmra.mrb[0].mxu0 %v64
  %v161 = vpop.f32.mrb[0].mxu0
  %v162 = vadd.f32 %v43, %v161
  %v163 = vpop.f32.mrb[0].mxu0
  %164 = vmatprep.mubr.f32.mxu0 0.0
  %165 = vmatmul.mubr.f32.gmra.mrb[0].mxu0 %v67
  %v166 = vpop.f32.mrb[0].mxu0
  %v167 = vadd.f32 %v43, %v166
  %v168 = vpop.f32.mrb[0].mxu0
  %169 = vmatprep.mubr.f32.mxu0 0.0
  %170 = vmatmul.mubr.f32.gmra.mrb[0].mxu0 %v70
  %v171 = vpop.f32.mrb[0].mxu0
  %v172 = vadd.f32 %v43, %v171
  %v173 = vpop.f32.mrb[0].mxu0
  %174 = vmatprep.mubr.f32.mxu0 0.0
  %175 = vmatmul.mubr.f32.gmra.mrb[0].mxu0 %v73
  %v176 = vpop.f32.mrb[0].mxu0
  %v177 = vadd.f32 %v43, %v176
  %v178 = vpop.f32.mrb[0].mxu0
  %v179 = vadd.f32 %v47, %v178
  %180 = vdwg.mxu0
  %v181 = vld [vmem:[%s2] sm:$0xff]
  %v182 = vld [vmem:[%s2 + $0x8] sm:$0xff]
  %v183 = vld [vmem:[%s2 + $0x10] sm:$0xff]
  %v184 = vld [vmem:[%s2 + $0x18] sm:$0xff]
  %vm185 = vcmask 261120
  %v187 = vsel %vm185, 0.0, 0
  %189 = vmatprep.subr.mxu0 0.0
  %190 = vmatpush1.msra.mxu0 %v181
  %191 = vmatprep.subr.mxu0 0.0
  %192 = vmatpush1.msra.mxu0 %v182
  %193 = vmatprep.subr.mxu0 0.0
  %194 = vmatpush1.msra.mxu0 %v183
  %195 = vmatprep.subr.mxu0 0.0
  %196 = vmatpush1.msra.mxu0 %v184
  %197 = vmatprep.subr.mxu0 0.0
  %198 = vmatpush1.msra.mxu0 0.0
  %199 = vmatprep.subr.mxu0 0.0
  %200 = vmatpush1.msra.mxu0 0.0
  %201 = vmatprep.subr.mxu0 0.0
  %202 = vmatpush1.msra.mxu0 0.0
  %203 = vmatprep.subr.mxu0 0.0
  %204 = vmatpush1.msra.mxu0 0.0
  %205 = vmatprep.subr.mxu0 0.0
  %206 = vmatpush1.msra.mxu0 0.0
  %207 = vmatprep.subr.mxu0 0.0
  %208 = vmatpush1.msra.mxu0 0.0
  %209 = vmatprep.subr.mxu0 0.0
  %210 = vmatpush1.msra.mxu0 0.0
  %211 = vmatprep.subr.mxu0 0.0
  %212 = vmatpush1.msra.mxu0 0.0
  %213 = vmatprep.subr.mxu0 0.0
  %214 = vmatpush1.msra.mxu0 0.0
  %215 = vmatprep.subr.mxu0 0.0
  %216 = vmatpush1.msra.mxu0 0.0
  %217 = vmatprep.subr.mxu0 0.0
  %218 = vmatpush1.msra.mxu0 0.0
  %219 = vmatprep.subr.mxu0 0.0
  %220 = vmatpush1.msra.mxu0 0.0
  %221 = vmatprep.subr.mxu0 0.0
  %222 = vmatpush1.msra.mxu0 0.0
  %223 = vmatprep.subr.mxu0 0.0
  %224 = vmatpush1.msra.mxu0 0.0
  %225 = vmatprep.subr.mxu0 0.0
  %226 = vmatpush1.msra.mxu0 0.0
  %227 = vmatprep.subr.mxu0 0.0
  %228 = vmatpush1.msra.mxu0 0.0
  %229 = vmatprep.subr.mxu0 0.0
  %230 = vmatpush1.msra.mxu0 0.0
  %231 = vmatprep.subr.mxu0 0.0
  %232 = vmatpush1.msra.mxu0 0.0
  %233 = vmatprep.subr.mxu0 0.0
  %234 = vmatpush1.msra.mxu0 0.0
  %235 = vmatprep.subr.mxu0 0.0
  %236 = vmatpush1.msra.mxu0 0.0
  %237 = vmatprep.subr.mxu0 0.0
  %238 = vmatpush1.msra.mxu0 0.0
  %239 = vmatprep.subr.mxu0 0.0
  %240 = vmatpush1.msra.mxu0 0.0
  %241 = vmatprep.subr.mxu0 0.0
  %242 = vmatpush1.msra.mxu0 0.0
  %243 = vmatprep.subr.mxu0 0.0
  %244 = vmatpush1.msra.mxu0 0.0
  %245 = vmatprep.subr.mxu0 0.0
  %246 = vmatpush1.msra.mxu0 0.0
  %247 = vmatprep.subr.mxu0 0.0
  %248 = vmatpush1.msra.mxu0 0.0
  %249 = vmatprep.subr.mxu0 0.0
  %250 = vmatpush1.msra.mxu0 0.0
  %251 = vmatprep.subr.mxu0 0.0
  %252 = vmatpush1.msra.mxu0 0.0
  %253 = vmatprep.mubr.f32.mxu0 0.0
  %254 = vmatmul.mubr.f32.gmra.mrb[0].mxu0 %v187
  %v255 = vpop.f32.mrb[0].mxu0
  %v256 = vadd.f32 0.0, %v255
  %v257 = vpop.f32.mrb[0].mxu0
  %258 = vdwg.mxu0
  %v259 = vadd.f32 %v142, %v256
  %v260 = vxor.u32 %v259, 2147483648
  %v261 = vmul.f32 %v260, 1.442695
  %v262 = vpow.pop %v261
  %v263 = vadd.f32 %v262, 1.0
  %v264 = vrcp.pop %v263
  %v265 = vmul.f32 1.0, %v264
  %v266 = vtanh.pop %v259
  %v267 = vmul.f32 %v265, 0.0
  %269 = vrot.lane.b32.xlu0 %v266, 64
  %v270 = vpop.permute.xlu0 %269
  %v272 = vmul.f32 %v265, %v270
  %274 = vrot.lane.b32.xlu0 %v272, 32
  %v275 = vpop.permute.xlu0 %274
  %v277 = vadd.f32 %v267, %v275
  %v278 = vtanh.pop %v277
  %280 = vrot.lane.b32.xlu0 %v278, 64
  %v281 = vpop.permute.xlu0 %280
  %v283 = vmul.f32 %v265, %v281
  %285 = vrot.lane.b32.xlu0 %v283, 32
  %v286 = vpop.permute.xlu0 %285
  %v287 = vsel %vm185, %v286, 0
  %289 = vmatprep.subr.mxu0 0.0
  %290 = vmatpush1.msra.mxu0 %v181
  %291 = vmatprep.subr.mxu0 0.0
  %292 = vmatpush1.msra.mxu0 %v182
  %293 = vmatprep.subr.mxu0 0.0
  %294 = vmatpush1.msra.mxu0 %v183
  %295 = vmatprep.subr.mxu0 0.0
  %296 = vmatpush1.msra.mxu0 %v184
  %297 = vmatprep.subr.mxu0 0.0
  %298 = vmatpush1.msra.mxu0 0.0
  %299 = vmatprep.subr.mxu0 0.0
  %300 = vmatpush1.msra.mxu0 0.0
  %301 = vmatprep.subr.mxu0 0.0
  %302 = vmatpush1.msra.mxu0 0.0
  %303 = vmatprep.subr.mxu0 0.0
  %304 = vmatpush1.msra.mxu0 0.0
  %305 = vmatprep.subr.mxu0 0.0
  %306 = vmatpush1.msra.mxu0 0.0
  %307 = vmatprep.subr.mxu0 0.0
  %308 = vmatpush1.msra.mxu0 0.0
  %309 = vmatprep.subr.mxu0 0.0
  %310 = vmatpush1.msra.mxu0 0.0
  %311 = vmatprep.subr.mxu0 0.0
  %312 = vmatpush1.msra.mxu0 0.0
  %313 = vmatprep.subr.mxu0 0.0
  %314 = vmatpush1.msra.mxu0 0.0
  %315 = vmatprep.subr.mxu0 0.0
  %316 = vmatpush1.msra.mxu0 0.0
  %317 = vmatprep.subr.mxu0 0.0
  %318 = vmatpush1.msra.mxu0 0.0
  %319 = vmatprep.subr.mxu0 0.0
  %320 = vmatpush1.msra.mxu0 0.0
  %321 = vmatprep.subr.mxu0 0.0
  %322 = vmatpush1.msra.mxu0 0.0
  %323 = vmatprep.subr.mxu0 0.0
  %324 = vmatpush1.msra.mxu0 0.0
  %325 = vmatprep.subr.mxu0 0.0
  %326 = vmatpush1.msra.mxu0 0.0
  %327 = vmatprep.subr.mxu0 0.0
  %328 = vmatpush1.msra.mxu0 0.0
  %329 = vmatprep.subr.mxu0 0.0
  %330 = vmatpush1.msra.mxu0 0.0
  %331 = vmatprep.subr.mxu0 0.0
  %332 = vmatpush1.msra.mxu0 0.0
  %333 = vmatprep.subr.mxu0 0.0
  %334 = vmatpush1.msra.mxu0 0.0
  %335 = vmatprep.subr.mxu0 0.0
  %336 = vmatpush1.msra.mxu0 0.0
  %337 = vmatprep.subr.mxu0 0.0
  %338 = vmatpush1.msra.mxu0 0.0
  %339 = vmatprep.subr.mxu0 0.0
  %340 = vmatpush1.msra.mxu0 0.0
  %341 = vmatprep.subr.mxu0 0.0
  %342 = vmatpush1.msra.mxu0 0.0
  %343 = vmatprep.subr.mxu0 0.0
  %344 = vmatpush1.msra.mxu0 0.0
  %345 = vmatprep.subr.mxu0 0.0
  %346 = vmatpush1.msra.mxu0 0.0
  %347 = vmatprep.subr.mxu0 0.0
  %348 = vmatpush1.msra.mxu0 0.0
  %349 = vmatprep.subr.mxu0 0.0
  %350 = vmatpush1.msra.mxu0 0.0
  %351 = vmatprep.subr.mxu0 0.0
  %352 = vmatpush1.msra.mxu0 0.0
  %353 = vmatprep.mubr.f32.mxu0 0.0
  %354 = vmatmul.mubr.f32.gmra.mrb[0].mxu0 %v287
  %v355 = vpop.f32.mrb[0].mxu0
  %v356 = vadd.f32 0.0, %v355
  %v357 = vpop.f32.mrb[0].mxu0
  %358 = vdwg.mxu0
  %v359 = vadd.f32 %v147, %v356
  %v360 = vxor.u32 %v359, 2147483648
  %v361 = vmul.f32 %v360, 1.442695
  %v362 = vpow.pop %v361
  %v363 = vadd.f32 %v362, 1.0
  %v364 = vrcp.pop %v363
  %v365 = vmul.f32 1.0, %v364
  %v366 = vtanh.pop %v359
  %v367 = vmul.f32 %v365, %v277
  %369 = vrot.lane.b32.xlu0 %v366, 64
  %v370 = vpop.permute.xlu0 %369
  %v372 = vmul.f32 %v365, %v370
  %374 = vrot.lane.b32.xlu0 %v372, 32
  %v375 = vpop.permute.xlu0 %374
  %v377 = vadd.f32 %v367, %v375
  %v378 = vtanh.pop %v377
  %380 = vrot.lane.b32.xlu0 %v378, 64
  %v381 = vpop.permute.xlu0 %380
  %v383 = vmul.f32 %v365, %v381
  %385 = vrot.lane.b32.xlu0 %v383, 32
  %v386 = vpop.permute.xlu0 %385
  %v387 = vsel %vm185, %v386, 0
  %389 = vmatprep.subr.mxu0 0.0
  %390 = vmatpush1.msra.mxu0 %v181
  %391 = vmatprep.subr.mxu0 0.0
  %392 = vmatpush1.msra.mxu0 %v182
  %393 = vmatprep.subr.mxu0 0.0
  %394 = vmatpush1.msra.mxu0 %v183
  %395 = vmatprep.subr.mxu0 0.0
  %396 = vmatpush1.msra.mxu0 %v184
  %397 = vmatprep.subr.mxu0 0.0
  %398 = vmatpush1.msra.mxu0 0.0
  %399 = vmatprep.subr.mxu0 0.0
  %400 = vmatpush1.msra.mxu0 0.0
  %401 = vmatprep.subr.mxu0 0.0
  %402 = vmatpush1.msra.mxu0 0.0
  %403 = vmatprep.subr.mxu0 0.0
  %404 = vmatpush1.msra.mxu0 0.0
  %405 = vmatprep.subr.mxu0 0.0
  %406 = vmatpush1.msra.mxu0 0.0
  %407 = vmatprep.subr.mxu0 0.0
  %408 = vmatpush1.msra.mxu0 0.0
  %409 = vmatprep.subr.mxu0 0.0
  %410 = vmatpush1.msra.mxu0 0.0
  %411 = vmatprep.subr.mxu0 0.0
  %412 = vmatpush1.msra.mxu0 0.0
  %413 = vmatprep.subr.mxu0 0.0
  %414 = vmatpush1.msra.mxu0 0.0
  %415 = vmatprep.subr.mxu0 0.0
  %416 = vmatpush1.msra.mxu0 0.0
  %417 = vmatprep.subr.mxu0 0.0
  %418 = vmatpush1.msra.mxu0 0.0
  %419 = vmatprep.subr.mxu0 0.0
  %420 = vmatpush1.msra.mxu0 0.0
  %421 = vmatprep.subr.mxu0 0.0
  %422 = vmatpush1.msra.mxu0 0.0
  %423 = vmatprep.subr.mxu0 0.0
  %424 = vmatpush1.msra.mxu0 0.0
  %425 = vmatprep.subr.mxu0 0.0
  %426 = vmatpush1.msra.mxu0 0.0
  %427 = vmatprep.subr.mxu0 0.0
  %428 = vmatpush1.msra.mxu0 0.0
  %429 = vmatprep.subr.mxu0 0.0
  %430 = vmatpush1.msra.mxu0 0.0
  %431 = vmatprep.subr.mxu0 0.0
  %432 = vmatpush1.msra.mxu0 0.0
  %433 = vmatprep.subr.mxu0 0.0
  %434 = vmatpush1.msra.mxu0 0.0
  %435 = vmatprep.subr.mxu0 0.0
  %436 = vmatpush1.msra.mxu0 0.0
  %437 = vmatprep.subr.mxu0 0.0
  %438 = vmatpush1.msra.mxu0 0.0
  %439 = vmatprep.subr.mxu0 0.0
  %440 = vmatpush1.msra.mxu0 0.0
  %441 = vmatprep.subr.mxu0 0.0
  %442 = vmatpush1.msra.mxu0 0.0
  %443 = vmatprep.subr.mxu0 0.0
  %444 = vmatpush1.msra.mxu0 0.0
  %445 = vmatprep.subr.mxu0 0.0
  %446 = vmatpush1.msra.mxu0 0.0
  %447 = vmatprep.subr.mxu0 0.0
  %448 = vmatpush1.msra.mxu0 0.0
  %449 = vmatprep.subr.mxu0 0.0
  %450 = vmatpush1.msra.mxu0 0.0
  %451 = vmatprep.subr.mxu0 0.0
  %452 = vmatpush1.msra.mxu0 0.0
  %453 = vmatprep.mubr.f32.mxu0 0.0
  %454 = vmatmul.mubr.f32.gmra.mrb[0].mxu0 %v387
  %v455 = vpop.f32.mrb[0].mxu0
  %v456 = vadd.f32 0.0, %v455
  %v457 = vpop.f32.mrb[0].mxu0
  %458 = vdwg.mxu0
  %v459 = vadd.f32 %v152, %v456
  %v460 = vxor.u32 %v459, 2147483648
  %v461 = vmul.f32 %v460, 1.442695
  %v462 = vpow.pop %v461
  %v463 = vadd.f32 %v462, 1.0
  %v464 = vrcp.pop %v463
  %v465 = vmul.f32 1.0, %v464
  %v466 = vtanh.pop %v459
  %v467 = vmul.f32 %v465, %v377
  %469 = vrot.lane.b32.xlu0 %v466, 64
  %v470 = vpop.permute.xlu0 %469
  %v472 = vmul.f32 %v465, %v470
  %474 = vrot.lane.b32.xlu0 %v472, 32
  %v475 = vpop.permute.xlu0 %474
  %v477 = vadd.f32 %v467, %v475
  %v478 = vtanh.pop %v477
  %480 = vrot.lane.b32.xlu0 %v478, 64
  %v481 = vpop.permute.xlu0 %480
  %v483 = vmul.f32 %v465, %v481
  %485 = vrot.lane.b32.xlu0 %v483, 32
  %v486 = vpop.permute.xlu0 %485
  %v487 = vsel %vm185, %v486, 0
  %489 = vmatprep.subr.mxu0 0.0
  %490 = vmatpush1.msra.mxu0 %v181
  %491 = vmatprep.subr.mxu0 0.0
  %492 = vmatpush1.msra.mxu0 %v182
  %493 = vmatprep.subr.mxu0 0.0
  %494 = vmatpush1.msra.mxu0 %v183
  %495 = vmatprep.subr.mxu0 0.0
  %496 = vmatpush1.msra.mxu0 %v184
  %497 = vmatprep.subr.mxu0 0.0
  %498 = vmatpush1.msra.mxu0 0.0
  %499 = vmatprep.subr.mxu0 0.0
  %500 = vmatpush1.msra.mxu0 0.0
  %501 = vmatprep.subr.mxu0 0.0
  %502 = vmatpush1.msra.mxu0 0.0
  %503 = vmatprep.subr.mxu0 0.0
  %504 = vmatpush1.msra.mxu0 0.0
  %505 = vmatprep.subr.mxu0 0.0
  %506 = vmatpush1.msra.mxu0 0.0
  %507 = vmatprep.subr.mxu0 0.0
  %508 = vmatpush1.msra.mxu0 0.0
  %509 = vmatprep.subr.mxu0 0.0
  %510 = vmatpush1.msra.mxu0 0.0
  %511 = vmatprep.subr.mxu0 0.0
  %512 = vmatpush1.msra.mxu0 0.0
  %513 = vmatprep.subr.mxu0 0.0
  %514 = vmatpush1.msra.mxu0 0.0
  %515 = vmatprep.subr.mxu0 0.0
  %516 = vmatpush1.msra.mxu0 0.0
  %517 = vmatprep.subr.mxu0 0.0
  %518 = vmatpush1.msra.mxu0 0.0
  %519 = vmatprep.subr.mxu0 0.0
  %520 = vmatpush1.msra.mxu0 0.0
  %521 = vmatprep.subr.mxu0 0.0
  %522 = vmatpush1.msra.mxu0 0.0
  %523 = vmatprep.subr.mxu0 0.0
  %524 = vmatpush1.msra.mxu0 0.0
  %525 = vmatprep.subr.mxu0 0.0
  %526 = vmatpush1.msra.mxu0 0.0
  %527 = vmatprep.subr.mxu0 0.0
  %528 = vmatpush1.msra.mxu0 0.0
  %529 = vmatprep.subr.mxu0 0.0
  %530 = vmatpush1.msra.mxu0 0.0
  %531 = vmatprep.subr.mxu0 0.0
  %532 = vmatpush1.msra.mxu0 0.0
  %533 = vmatprep.subr.mxu0 0.0
  %534 = vmatpush1.msra.mxu0 0.0
  %535 = vmatprep.subr.mxu0 0.0
  %536 = vmatpush1.msra.mxu0 0.0
  %537 = vmatprep.subr.mxu0 0.0
  %538 = vmatpush1.msra.mxu0 0.0
  %539 = vmatprep.subr.mxu0 0.0
  %540 = vmatpush1.msra.mxu0 0.0
  %541 = vmatprep.subr.mxu0 0.0
  %542 = vmatpush1.msra.mxu0 0.0
  %543 = vmatprep.subr.mxu0 0.0
  %544 = vmatpush1.msra.mxu0 0.0
  %545 = vmatprep.subr.mxu0 0.0
  %546 = vmatpush1.msra.mxu0 0.0
  %547 = vmatprep.subr.mxu0 0.0
  %548 = vmatpush1.msra.mxu0 0.0
  %549 = vmatprep.subr.mxu0 0.0
  %550 = vmatpush1.msra.mxu0 0.0
  %551 = vmatprep.subr.mxu0 0.0
  %552 = vmatpush1.msra.mxu0 0.0
  %553 = vmatprep.mubr.f32.mxu0 0.0
  %554 = vmatmul.mubr.f32.gmra.mrb[0].mxu0 %v487
  %v555 = vpop.f32.mrb[0].mxu0
  %v556 = vadd.f32 0.0, %v555
  %v557 = vpop.f32.mrb[0].mxu0
  %558 = vdwg.mxu0
  %v559 = vadd.f32 %v157, %v556
  %v560 = vxor.u32 %v559, 2147483648
  %v561 = vmul.f32 %v560, 1.442695
  %v562 = vpow.pop %v561
  %v563 = vadd.f32 %v562, 1.0
  %v564 = vrcp.pop %v563
  %v565 = vmul.f32 1.0, %v564
  %v566 = vtanh.pop %v559
  %v567 = vmul.f32 %v565, %v477
  %569 = vrot.lane.b32.xlu0 %v566, 64
  %v570 = vpop.permute.xlu0 %569
  %v572 = vmul.f32 %v565, %v570
  %574 = vrot.lane.b32.xlu0 %v572, 32
  %v575 = vpop.permute.xlu0 %574
  %v577 = vadd.f32 %v567, %v575
  %v578 = vtanh.pop %v577
  %580 = vrot.lane.b32.xlu0 %v578, 64
  %v581 = vpop.permute.xlu0 %580
  %v583 = vmul.f32 %v565, %v581
  %585 = vrot.lane.b32.xlu0 %v583, 32
  %v586 = vpop.permute.xlu0 %585
  %v587 = vsel %vm185, %v586, 0
  %589 = vmatprep.subr.mxu0 0.0
  %590 = vmatpush1.msra.mxu0 %v181
  %591 = vmatprep.subr.mxu0 0.0
  %592 = vmatpush1.msra.mxu0 %v182
  %593 = vmatprep.subr.mxu0 0.0
  %594 = vmatpush1.msra.mxu0 %v183
  %595 = vmatprep.subr.mxu0 0.0
  %596 = vmatpush1.msra.mxu0 %v184
  %597 = vmatprep.subr.mxu0 0.0
  %598 = vmatpush1.msra.mxu0 0.0
  %599 = vmatprep.subr.mxu0 0.0
  %600 = vmatpush1.msra.mxu0 0.0
  %601 = vmatprep.subr.mxu0 0.0
  %602 = vmatpush1.msra.mxu0 0.0
  %603 = vmatprep.subr.mxu0 0.0
  %604 = vmatpush1.msra.mxu0 0.0
  %605 = vmatprep.subr.mxu0 0.0
  %606 = vmatpush1.msra.mxu0 0.0
  %607 = vmatprep.subr.mxu0 0.0
  %608 = vmatpush1.msra.mxu0 0.0
  %609 = vmatprep.subr.mxu0 0.0
  %610 = vmatpush1.msra.mxu0 0.0
  %611 = vmatprep.subr.mxu0 0.0
  %612 = vmatpush1.msra.mxu0 0.0
  %613 = vmatprep.subr.mxu0 0.0
  %614 = vmatpush1.msra.mxu0 0.0
  %615 = vmatprep.subr.mxu0 0.0
  %616 = vmatpush1.msra.mxu0 0.0
  %617 = vmatprep.subr.mxu0 0.0
  %618 = vmatpush1.msra.mxu0 0.0
  %619 = vmatprep.subr.mxu0 0.0
  %620 = vmatpush1.msra.mxu0 0.0
  %621 = vmatprep.subr.mxu0 0.0
  %622 = vmatpush1.msra.mxu0 0.0
  %623 = vmatprep.subr.mxu0 0.0
  %624 = vmatpush1.msra.mxu0 0.0
  %625 = vmatprep.subr.mxu0 0.0
  %626 = vmatpush1.msra.mxu0 0.0
  %627 = vmatprep.subr.mxu0 0.0
  %628 = vmatpush1.msra.mxu0 0.0
  %629 = vmatprep.subr.mxu0 0.0
  %630 = vmatpush1.msra.mxu0 0.0
  %631 = vmatprep.subr.mxu0 0.0
  %632 = vmatpush1.msra.mxu0 0.0
  %633 = vmatprep.subr.mxu0 0.0
  %634 = vmatpush1.msra.mxu0 0.0
  %635 = vmatprep.subr.mxu0 0.0
  %636 = vmatpush1.msra.mxu0 0.0
  %637 = vmatprep.subr.mxu0 0.0
  %638 = vmatpush1.msra.mxu0 0.0
  %639 = vmatprep.subr.mxu0 0.0
  %640 = vmatpush1.msra.mxu0 0.0
  %641 = vmatprep.subr.mxu0 0.0
  %642 = vmatpush1.msra.mxu0 0.0
  %643 = vmatprep.subr.mxu0 0.0
  %644 = vmatpush1.msra.mxu0 0.0
  %645 = vmatprep.subr.mxu0 0.0
  %646 = vmatpush1.msra.mxu0 0.0
  %647 = vmatprep.subr.mxu0 0.0
  %648 = vmatpush1.msra.mxu0 0.0
  %649 = vmatprep.subr.mxu0 0.0
  %650 = vmatpush1.msra.mxu0 0.0
  %651 = vmatprep.subr.mxu0 0.0
  %652 = vmatpush1.msra.mxu0 0.0
  %653 = vmatprep.mubr.f32.mxu0 0.0
  %654 = vmatmul.mubr.f32.gmra.mrb[0].mxu0 %v587
  %v655 = vpop.f32.mrb[0].mxu0
  %v656 = vadd.f32 0.0, %v655
  %v657 = vpop.f32.mrb[0].mxu0
  %658 = vdwg.mxu0
  %v659 = vadd.f32 %v162, %v656
  %v660 = vxor.u32 %v659, 2147483648
  %v661 = vmul.f32 %v660, 1.442695
  %v662 = vpow.pop %v661
  %v663 = vadd.f32 %v662, 1.0
  %v664 = vrcp.pop %v663
  %v665 = vmul.f32 1.0, %v664
  %v666 = vtanh.pop %v659
  %v667 = vmul.f32 %v665, %v577
  %669 = vrot.lane.b32.xlu0 %v666, 64
  %v670 = vpop.permute.xlu0 %669
  %v672 = vmul.f32 %v665, %v670
  %674 = vrot.lane.b32.xlu0 %v672, 32
  %v675 = vpop.permute.xlu0 %674
  %v677 = vadd.f32 %v667, %v675
  %v678 = vtanh.pop %v677
  %680 = vrot.lane.b32.xlu0 %v678, 64
  %v681 = vpop.permute.xlu0 %680
  %v683 = vmul.f32 %v665, %v681
  %685 = vrot.lane.b32.xlu0 %v683, 32
  %v686 = vpop.permute.xlu0 %685
  %v687 = vsel %vm185, %v686, 0
  %689 = vmatprep.subr.mxu0 0.0
  %690 = vmatpush1.msra.mxu0 %v181
  %691 = vmatprep.subr.mxu0 0.0
  %692 = vmatpush1.msra.mxu0 %v182
  %693 = vmatprep.subr.mxu0 0.0
  %694 = vmatpush1.msra.mxu0 %v183
  %695 = vmatprep.subr.mxu0 0.0
  %696 = vmatpush1.msra.mxu0 %v184
  %697 = vmatprep.subr.mxu0 0.0
  %698 = vmatpush1.msra.mxu0 0.0
  %699 = vmatprep.subr.mxu0 0.0
  %700 = vmatpush1.msra.mxu0 0.0
  %701 = vmatprep.subr.mxu0 0.0
  %702 = vmatpush1.msra.mxu0 0.0
  %703 = vmatprep.subr.mxu0 0.0
  %704 = vmatpush1.msra.mxu0 0.0
  %705 = vmatprep.subr.mxu0 0.0
  %706 = vmatpush1.msra.mxu0 0.0
  %707 = vmatprep.subr.mxu0 0.0
  %708 = vmatpush1.msra.mxu0 0.0
  %709 = vmatprep.subr.mxu0 0.0
  %710 = vmatpush1.msra.mxu0 0.0
  %711 = vmatprep.subr.mxu0 0.0
  %712 = vmatpush1.msra.mxu0 0.0
  %713 = vmatprep.subr.mxu0 0.0
  %714 = vmatpush1.msra.mxu0 0.0
  %715 = vmatprep.subr.mxu0 0.0
  %716 = vmatpush1.msra.mxu0 0.0
  %717 = vmatprep.subr.mxu0 0.0
  %718 = vmatpush1.msra.mxu0 0.0
  %719 = vmatprep.subr.mxu0 0.0
  %720 = vmatpush1.msra.mxu0 0.0
  %721 = vmatprep.subr.mxu0 0.0
  %722 = vmatpush1.msra.mxu0 0.0
  %723 = vmatprep.subr.mxu0 0.0
  %724 = vmatpush1.msra.mxu0 0.0
  %725 = vmatprep.subr.mxu0 0.0
  %726 = vmatpush1.msra.mxu0 0.0
  %727 = vmatprep.subr.mxu0 0.0
  %728 = vmatpush1.msra.mxu0 0.0
  %729 = vmatprep.subr.mxu0 0.0
  %730 = vmatpush1.msra.mxu0 0.0
  %731 = vmatprep.subr.mxu0 0.0
  %732 = vmatpush1.msra.mxu0 0.0
  %733 = vmatprep.subr.mxu0 0.0
  %734 = vmatpush1.msra.mxu0 0.0
  %735 = vmatprep.subr.mxu0 0.0
  %736 = vmatpush1.msra.mxu0 0.0
  %737 = vmatprep.subr.mxu0 0.0
  %738 = vmatpush1.msra.mxu0 0.0
  %739 = vmatprep.subr.mxu0 0.0
  %740 = vmatpush1.msra.mxu0 0.0
  %741 = vmatprep.subr.mxu0 0.0
  %742 = vmatpush1.msra.mxu0 0.0
  %743 = vmatprep.subr.mxu0 0.0
  %744 = vmatpush1.msra.mxu0 0.0
  %745 = vmatprep.subr.mxu0 0.0
  %746 = vmatpush1.msra.mxu0 0.0
  %747 = vmatprep.subr.mxu0 0.0
  %748 = vmatpush1.msra.mxu0 0.0
  %749 = vmatprep.subr.mxu0 0.0
  %750 = vmatpush1.msra.mxu0 0.0
  %751 = vmatprep.subr.mxu0 0.0
  %752 = vmatpush1.msra.mxu0 0.0
  %753 = vmatprep.mubr.f32.mxu0 0.0
  %754 = vmatmul.mubr.f32.gmra.mrb[0].mxu0 %v687
  %v755 = vpop.f32.mrb[0].mxu0
  %v756 = vadd.f32 0.0, %v755
  %v757 = vpop.f32.mrb[0].mxu0
  %758 = vdwg.mxu0
  %v759 = vadd.f32 %v167, %v756
  %v760 = vxor.u32 %v759, 2147483648
  %v761 = vmul.f32 %v760, 1.442695
  %v762 = vpow.pop %v761
  %v763 = vadd.f32 %v762, 1.0
  %v764 = vrcp.pop %v763
  %v765 = vmul.f32 1.0, %v764
  %v766 = vtanh.pop %v759
  %v767 = vmul.f32 %v765, %v677
  %769 = vrot.lane.b32.xlu0 %v766, 64
  %v770 = vpop.permute.xlu0 %769
  %v772 = vmul.f32 %v765, %v770
  %774 = vrot.lane.b32.xlu0 %v772, 32
  %v775 = vpop.permute.xlu0 %774
  %v777 = vadd.f32 %v767, %v775
  %v778 = vtanh.pop %v777
  %780 = vrot.lane.b32.xlu0 %v778, 64
  %v781 = vpop.permute.xlu0 %780
  %v783 = vmul.f32 %v765, %v781
  %785 = vrot.lane.b32.xlu0 %v783, 32
  %v786 = vpop.permute.xlu0 %785
  %v787 = vsel %vm185, %v786, 0
  %789 = vmatprep.subr.mxu0 0.0
  %790 = vmatpush1.msra.mxu0 %v181
  %791 = vmatprep.subr.mxu0 0.0
  %792 = vmatpush1.msra.mxu0 %v182
  %793 = vmatprep.subr.mxu0 0.0
  %794 = vmatpush1.msra.mxu0 %v183
  %795 = vmatprep.subr.mxu0 0.0
  %796 = vmatpush1.msra.mxu0 %v184
  %797 = vmatprep.subr.mxu0 0.0
  %798 = vmatpush1.msra.mxu0 0.0
  %799 = vmatprep.subr.mxu0 0.0
  %800 = vmatpush1.msra.mxu0 0.0
  %801 = vmatprep.subr.mxu0 0.0
  %802 = vmatpush1.msra.mxu0 0.0
  %803 = vmatprep.subr.mxu0 0.0
  %804 = vmatpush1.msra.mxu0 0.0
  %805 = vmatprep.subr.mxu0 0.0
  %806 = vmatpush1.msra.mxu0 0.0
  %807 = vmatprep.subr.mxu0 0.0
  %808 = vmatpush1.msra.mxu0 0.0
  %809 = vmatprep.subr.mxu0 0.0
  %810 = vmatpush1.msra.mxu0 0.0
  %811 = vmatprep.subr.mxu0 0.0
  %812 = vmatpush1.msra.mxu0 0.0
  %813 = vmatprep.subr.mxu0 0.0
  %814 = vmatpush1.msra.mxu0 0.0
  %815 = vmatprep.subr.mxu0 0.0
  %816 = vmatpush1.msra.mxu0 0.0
  %817 = vmatprep.subr.mxu0 0.0
  %818 = vmatpush1.msra.mxu0 0.0
  %819 = vmatprep.subr.mxu0 0.0
  %820 = vmatpush1.msra.mxu0 0.0
  %821 = vmatprep.subr.mxu0 0.0
  %822 = vmatpush1.msra.mxu0 0.0
  %823 = vmatprep.subr.mxu0 0.0
  %824 = vmatpush1.msra.mxu0 0.0
  %825 = vmatprep.subr.mxu0 0.0
  %826 = vmatpush1.msra.mxu0 0.0
  %827 = vmatprep.subr.mxu0 0.0
  %828 = vmatpush1.msra.mxu0 0.0
  %829 = vmatprep.subr.mxu0 0.0
  %830 = vmatpush1.msra.mxu0 0.0
  %831 = vmatprep.subr.mxu0 0.0
  %832 = vmatpush1.msra.mxu0 0.0
  %833 = vmatprep.subr.mxu0 0.0
  %834 = vmatpush1.msra.mxu0 0.0
  %835 = vmatprep.subr.mxu0 0.0
  %836 = vmatpush1.msra.mxu0 0.0
  %837 = vmatprep.subr.mxu0 0.0
  %838 = vmatpush1.msra.mxu0 0.0
  %839 = vmatprep.subr.mxu0 0.0
  %840 = vmatpush1.msra.mxu0 0.0
  %841 = vmatprep.subr.mxu0 0.0
  %842 = vmatpush1.msra.mxu0 0.0
  %843 = vmatprep.subr.mxu0 0.0
  %844 = vmatpush1.msra.mxu0 0.0
  %845 = vmatprep.subr.mxu0 0.0
  %846 = vmatpush1.msra.mxu0 0.0
  %847 = vmatprep.subr.mxu0 0.0
  %848 = vmatpush1.msra.mxu0 0.0
  %849 = vmatprep.subr.mxu0 0.0
  %850 = vmatpush1.msra.mxu0 0.0
  %851 = vmatprep.subr.mxu0 0.0
  %852 = vmatpush1.msra.mxu0 0.0
  %853 = vmatprep.mubr.f32.mxu0 0.0
  %854 = vmatmul.mubr.f32.gmra.mrb[0].mxu0 %v787
  %v855 = vpop.f32.mrb[0].mxu0
  %v856 = vadd.f32 0.0, %v855
  %v857 = vpop.f32.mrb[0].mxu0
  %858 = vdwg.mxu0
  %v859 = vadd.f32 %v172, %v856
  %v860 = vxor.u32 %v859, 2147483648
  %v861 = vmul.f32 %v860, 1.442695
  %v862 = vpow.pop %v861
  %v863 = vadd.f32 %v862, 1.0
  %v864 = vrcp.pop %v863
  %v865 = vmul.f32 1.0, %v864
  %v866 = vtanh.pop %v859
  %v867 = vmul.f32 %v865, %v777
  %869 = vrot.lane.b32.xlu0 %v866, 64
  %v870 = vpop.permute.xlu0 %869
  %v872 = vmul.f32 %v865, %v870
  %874 = vrot.lane.b32.xlu0 %v872, 32
  %v875 = vpop.permute.xlu0 %874
  %v877 = vadd.f32 %v867, %v875
  %v878 = vtanh.pop %v877
  %880 = vrot.lane.b32.xlu0 %v878, 64
  %v881 = vpop.permute.xlu0 %880
  %v883 = vmul.f32 %v865, %v881
  %885 = vrot.lane.b32.xlu0 %v883, 32
  %v886 = vpop.permute.xlu0 %885
  %v887 = vsel %vm185, %v886, 0
  %889 = vmatprep.subr.mxu0 0.0
  %890 = vmatpush1.msra.mxu0 %v181
  %891 = vmatprep.subr.mxu0 0.0
  %892 = vmatpush1.msra.mxu0 %v182
  %893 = vmatprep.subr.mxu0 0.0
  %894 = vmatpush1.msra.mxu0 %v183
  %895 = vmatprep.subr.mxu0 0.0
  %896 = vmatpush1.msra.mxu0 %v184
  %897 = vmatprep.subr.mxu0 0.0
  %898 = vmatpush1.msra.mxu0 0.0
  %899 = vmatprep.subr.mxu0 0.0
  %900 = vmatpush1.msra.mxu0 0.0
  %901 = vmatprep.subr.mxu0 0.0
  %902 = vmatpush1.msra.mxu0 0.0
  %903 = vmatprep.subr.mxu0 0.0
  %904 = vmatpush1.msra.mxu0 0.0
  %905 = vmatprep.subr.mxu0 0.0
  %906 = vmatpush1.msra.mxu0 0.0
  %907 = vmatprep.subr.mxu0 0.0
  %908 = vmatpush1.msra.mxu0 0.0
  %909 = vmatprep.subr.mxu0 0.0
  %910 = vmatpush1.msra.mxu0 0.0
  %911 = vmatprep.subr.mxu0 0.0
  %912 = vmatpush1.msra.mxu0 0.0
  %913 = vmatprep.subr.mxu0 0.0
  %914 = vmatpush1.msra.mxu0 0.0
  %915 = vmatprep.subr.mxu0 0.0
  %916 = vmatpush1.msra.mxu0 0.0
  %917 = vmatprep.subr.mxu0 0.0
  %918 = vmatpush1.msra.mxu0 0.0
  %919 = vmatprep.subr.mxu0 0.0
  %920 = vmatpush1.msra.mxu0 0.0
  %921 = vmatprep.subr.mxu0 0.0
  %922 = vmatpush1.msra.mxu0 0.0
  %923 = vmatprep.subr.mxu0 0.0
  %924 = vmatpush1.msra.mxu0 0.0
  %925 = vmatprep.subr.mxu0 0.0
  %926 = vmatpush1.msra.mxu0 0.0
  %927 = vmatprep.subr.mxu0 0.0
  %928 = vmatpush1.msra.mxu0 0.0
  %929 = vmatprep.subr.mxu0 0.0
  %930 = vmatpush1.msra.mxu0 0.0
  %931 = vmatprep.subr.mxu0 0.0
  %932 = vmatpush1.msra.mxu0 0.0
  %933 = vmatprep.subr.mxu0 0.0
  %934 = vmatpush1.msra.mxu0 0.0
  %935 = vmatprep.subr.mxu0 0.0
  %936 = vmatpush1.msra.mxu0 0.0
  %937 = vmatprep.subr.mxu0 0.0
  %938 = vmatpush1.msra.mxu0 0.0
  %939 = vmatprep.subr.mxu0 0.0
  %940 = vmatpush1.msra.mxu0 0.0
  %941 = vmatprep.subr.mxu0 0.0
  %942 = vmatpush1.msra.mxu0 0.0
  %943 = vmatprep.subr.mxu0 0.0
  %944 = vmatpush1.msra.mxu0 0.0
  %945 = vmatprep.subr.mxu0 0.0
  %946 = vmatpush1.msra.mxu0 0.0
  %947 = vmatprep.subr.mxu0 0.0
  %948 = vmatpush1.msra.mxu0 0.0
  %949 = vmatprep.subr.mxu0 0.0
  %950 = vmatpush1.msra.mxu0 0.0
  %951 = vmatprep.subr.mxu0 0.0
  %952 = vmatpush1.msra.mxu0 0.0
  %953 = vmatprep.mubr.f32.mxu0 0.0
  %954 = vmatmul.mubr.f32.gmra.mrb[0].mxu0 %v887
  %v955 = vpop.f32.mrb[0].mxu0
  %v956 = vadd.f32 0.0, %v955
  %v957 = vpop.f32.mrb[0].mxu0
  %958 = vdwg.mxu0
  %v959 = vadd.f32 %v177, %v956
  %v960 = vxor.u32 %v959, 2147483648
  %v961 = vmul.f32 %v960, 1.442695
  %v962 = vpow.pop %v961
  %v963 = vadd.f32 %v962, 1.0
  %v964 = vrcp.pop %v963
  %v965 = vmul.f32 1.0, %v964
  %v966 = vtanh.pop %v959
  %v967 = vmul.f32 %v965, %v877
  %969 = vrot.lane.b32.xlu0 %v966, 64
  %v970 = vpop.permute.xlu0 %969
  %v972 = vmul.f32 %v965, %v970
  %974 = vrot.lane.b32.xlu0 %v972, 32
  %v975 = vpop.permute.xlu0 %974
  %v977 = vadd.f32 %v967, %v975
  %v978 = vtanh.pop %v977
  %980 = vrot.lane.b32.xlu0 %v978, 64
  %v981 = vpop.permute.xlu0 %980
  %v983 = vmul.f32 %v965, %v981
  %v984 = vxor.u32 %v179, 2147483648
  %v985 = vmul.f32 %v984, 1.442695
  %v986 = vpow.pop %v985
  %v987 = vadd.f32 %v986, 1.0
  %v988 = vrcp.pop %v987
  %v989 = vmul.f32 1.0, %v988
  %v990 = vtanh.pop %v179
  %992 = vrot.lane.b32.xlu0 %v990, 64
  %v993 = vpop.permute.xlu0 %992
  %v995 = vmul.f32 %v989, %v993
  %v996 = vtanh.pop %v995
  %998 = vrot.lane.b32.xlu0 %v996, 96
  %v999 = vpop.permute.xlu0 %998
  %v1001 = vmul.f32 %v989, %v999
  %1003 = vrot.lane.b32.xlu0 %v983, 32
  %v1004 = vpop.permute.xlu0 %1003
  %1007 = vrot.lane.b32.xlu0 %v1001, 64
  %v1008 = vpop.permute.xlu0 %1007
  %v1010 = vsel %vm185, %v1004, %v1008
  %v1011 = vld [vmem:[%s3] sm:$0xff]
  %v1012 = vld [vmem:[%s3 + $0x8] sm:$0xff]
  %v1013 = vld [vmem:[%s3 + $0x10] sm:$0xff]
  %v1014 = vld [vmem:[%s3 + $0x18] sm:$0xff]
  %v1015 = vld [vmem:[%s3 + $0x20] sm:$0xff]
  %v1016 = vld [vmem:[%s3 + $0x28] sm:$0xff]
  %v1017 = vld [vmem:[%s3 + $0x30] sm:$0xff]
  %v1018 = vld [vmem:[%s3 + $0x38] sm:$0xff]
  %v1019 = vld [vmem:[%s6 + $0x2] sm:$0x1]
  %v1021 = vlaneseq
  %v1022 = vshrl.u32 %v1021, 7
  %v1023 = vsub.s32 0, %v1022
  %v1024 = vrot.slane %v1019, %v1023
  %vm1026 = vcmask 523264
  %v1028 = vsel %vm1026, %v1010, 0
  %1030 = vmatprep.subr.mxu0 0.0
  %1031 = vmatpush1.msra.mxu0 %v1011
  %1032 = vmatprep.subr.mxu0 0.0
  %1033 = vmatpush1.msra.mxu0 %v1012
  %1034 = vmatprep.subr.mxu0 0.0
  %1035 = vmatpush1.msra.mxu0 %v1013
  %1036 = vmatprep.subr.mxu0 0.0
  %1037 = vmatpush1.msra.mxu0 %v1014
  %1038 = vmatprep.subr.mxu0 0.0
  %1039 = vmatpush1.msra.mxu0 %v1015
  %1040 = vmatprep.subr.mxu0 0.0
  %1041 = vmatpush1.msra.mxu0 %v1016
  %1042 = vmatprep.subr.mxu0 0.0
  %1043 = vmatpush1.msra.mxu0 %v1017
  %1044 = vmatprep.subr.mxu0 0.0
  %1045 = vmatpush1.msra.mxu0 %v1018
  %1046 = vmatprep.subr.mxu0 0.0
  %1047 = vmatpush1.msra.mxu0 0.0
  %1048 = vmatprep.subr.mxu0 0.0
  %1049 = vmatpush1.msra.mxu0 0.0
  %1050 = vmatprep.subr.mxu0 0.0
  %1051 = vmatpush1.msra.mxu0 0.0
  %1052 = vmatprep.subr.mxu0 0.0
  %1053 = vmatpush1.msra.mxu0 0.0
  %1054 = vmatprep.subr.mxu0 0.0
  %1055 = vmatpush1.msra.mxu0 0.0
  %1056 = vmatprep.subr.mxu0 0.0
  %1057 = vmatpush1.msra.mxu0 0.0
  %1058 = vmatprep.subr.mxu0 0.0
  %1059 = vmatpush1.msra.mxu0 0.0
  %1060 = vmatprep.subr.mxu0 0.0
  %1061 = vmatpush1.msra.mxu0 0.0
  %1062 = vmatprep.subr.mxu0 0.0
  %1063 = vmatpush1.msra.mxu0 0.0
  %1064 = vmatprep.subr.mxu0 0.0
  %1065 = vmatpush1.msra.mxu0 0.0
  %1066 = vmatprep.subr.mxu0 0.0
  %1067 = vmatpush1.msra.mxu0 0.0
  %1068 = vmatprep.subr.mxu0 0.0
  %1069 = vmatpush1.msra.mxu0 0.0
  %1070 = vmatprep.subr.mxu0 0.0
  %1071 = vmatpush1.msra.mxu0 0.0
  %1072 = vmatprep.subr.mxu0 0.0
  %1073 = vmatpush1.msra.mxu0 0.0
  %1074 = vmatprep.subr.mxu0 0.0
  %1075 = vmatpush1.msra.mxu0 0.0
  %1076 = vmatprep.subr.mxu0 0.0
  %1077 = vmatpush1.msra.mxu0 0.0
  %1078 = vmatprep.subr.mxu0 0.0
  %1079 = vmatpush1.msra.mxu0 0.0
  %1080 = vmatprep.subr.mxu0 0.0
  %1081 = vmatpush1.msra.mxu0 0.0
  %1082 = vmatprep.subr.mxu0 0.0
  %1083 = vmatpush1.msra.mxu0 0.0
  %1084 = vmatprep.subr.mxu0 0.0
  %1085 = vmatpush1.msra.mxu0 0.0
  %1086 = vmatprep.subr.mxu0 0.0
  %1087 = vmatpush1.msra.mxu0 0.0
  %1088 = vmatprep.subr.mxu0 0.0
  %1089 = vmatpush1.msra.mxu0 0.0
  %1090 = vmatprep.subr.mxu0 0.0
  %1091 = vmatpush1.msra.mxu0 0.0
  %1092 = vmatprep.subr.mxu0 0.0
  %1093 = vmatpush1.msra.mxu0 0.0
  %1094 = vmatprep.mubr.f32.mxu0 0.0
  %1095 = vmatmul.mubr.f32.gmra.mrb[0].mxu0 %v1028
  %v1096 = vpop.f32.mrb[0].mxu0
  %v1097 = vadd.f32 %v1024, %v1096
  %v1098 = vpop.f32.mrb[0].mxu0
  %1099 = vdwg.mxu0
  %vm1100 = vcmp.ge.f32.partialorder %v1097, 0.0
  %v1101 = vmul.f32 %v1097, 0.01
  %v1102 = vsel %vm1100, %v1097, %v1101
  %v1103 = vld [vmem:[%s4] sm:$0xff]
  %v1104 = vld [vmem:[%s4 + $0x8] sm:$0xff]
  %v1105 = vld [vmem:[%s4 + $0x10] sm:$0xff]
  %v1106 = vld [vmem:[%s4 + $0x18] sm:$0xff]
  %v1107 = vld [vmem:[%s4 + $0x20] sm:$0xff]
  %v1108 = vld [vmem:[%s4 + $0x28] sm:$0xff]
  %v1109 = vld [vmem:[%s4 + $0x30] sm:$0xff]
  %v1110 = vld [vmem:[%s4 + $0x38] sm:$0xff]
  %v1111 = vld [vmem:[%s6 + $0x3] sm:$0x1]
  %v1113 = vlaneseq
  %v1114 = vshrl.u32 %v1113, 7
  %v1115 = vsub.s32 0, %v1114
  %v1116 = vrot.slane %v1111, %v1115
  %v1119 = vsel %vm1026, %v1102, 0
  %1121 = vmatprep.subr.mxu0 0.0
  %1122 = vmatpush1.msra.mxu0 %v1103
  %1123 = vmatprep.subr.mxu0 0.0
  %1124 = vmatpush1.msra.mxu0 %v1104
  %1125 = vmatprep.subr.mxu0 0.0
  %1126 = vmatpush1.msra.mxu0 %v1105
  %1127 = vmatprep.subr.mxu0 0.0
  %1128 = vmatpush1.msra.mxu0 %v1106
  %1129 = vmatprep.subr.mxu0 0.0
  %1130 = vmatpush1.msra.mxu0 %v1107
  %1131 = vmatprep.subr.mxu0 0.0
  %1132 = vmatpush1.msra.mxu0 %v1108
  %1133 = vmatprep.subr.mxu0 0.0
  %1134 = vmatpush1.msra.mxu0 %v1109
  %1135 = vmatprep.subr.mxu0 0.0
  %1136 = vmatpush1.msra.mxu0 %v1110
  %1137 = vmatprep.subr.mxu0 0.0
  %1138 = vmatpush1.msra.mxu0 0.0
  %1139 = vmatprep.subr.mxu0 0.0
  %1140 = vmatpush1.msra.mxu0 0.0
  %1141 = vmatprep.subr.mxu0 0.0
  %1142 = vmatpush1.msra.mxu0 0.0
  %1143 = vmatprep.subr.mxu0 0.0
  %1144 = vmatpush1.msra.mxu0 0.0
  %1145 = vmatprep.subr.mxu0 0.0
  %1146 = vmatpush1.msra.mxu0 0.0
  %1147 = vmatprep.subr.mxu0 0.0
  %1148 = vmatpush1.msra.mxu0 0.0
  %1149 = vmatprep.subr.mxu0 0.0
  %1150 = vmatpush1.msra.mxu0 0.0
  %1151 = vmatprep.subr.mxu0 0.0
  %1152 = vmatpush1.msra.mxu0 0.0
  %1153 = vmatprep.subr.mxu0 0.0
  %1154 = vmatpush1.msra.mxu0 0.0
  %1155 = vmatprep.subr.mxu0 0.0
  %1156 = vmatpush1.msra.mxu0 0.0
  %1157 = vmatprep.subr.mxu0 0.0
  %1158 = vmatpush1.msra.mxu0 0.0
  %1159 = vmatprep.subr.mxu0 0.0
  %1160 = vmatpush1.msra.mxu0 0.0
  %1161 = vmatprep.subr.mxu0 0.0
  %1162 = vmatpush1.msra.mxu0 0.0
  %1163 = vmatprep.subr.mxu0 0.0
  %1164 = vmatpush1.msra.mxu0 0.0
  %1165 = vmatprep.subr.mxu0 0.0
  %1166 = vmatpush1.msra.mxu0 0.0
  %1167 = vmatprep.subr.mxu0 0.0
  %1168 = vmatpush1.msra.mxu0 0.0
  %1169 = vmatprep.subr.mxu0 0.0
  %1170 = vmatpush1.msra.mxu0 0.0
  %1171 = vmatprep.subr.mxu0 0.0
  %1172 = vmatpush1.msra.mxu0 0.0
  %1173 = vmatprep.subr.mxu0 0.0
  %1174 = vmatpush1.msra.mxu0 0.0
  %1175 = vmatprep.subr.mxu0 0.0
  %1176 = vmatpush1.msra.mxu0 0.0
  %1177 = vmatprep.subr.mxu0 0.0
  %1178 = vmatpush1.msra.mxu0 0.0
  %1179 = vmatprep.subr.mxu0 0.0
  %1180 = vmatpush1.msra.mxu0 0.0
  %1181 = vmatprep.subr.mxu0 0.0
  %1182 = vmatpush1.msra.mxu0 0.0
  %1183 = vmatprep.subr.mxu0 0.0
  %1184 = vmatpush1.msra.mxu0 0.0
  %1185 = vmatprep.mubr.f32.mxu0 0.0
  %1186 = vmatmul.mubr.f32.gmra.mrb[0].mxu0 %v1119
  %v1187 = vpop.f32.mrb[0].mxu0
  %v1188 = vadd.f32 %v1116, %v1187
  %v1189 = vpop.f32.mrb[0].mxu0
  %1190 = vdwg.mxu0
  %vm1191 = vcmp.ge.f32.partialorder %v1188, 0.0
  %v1192 = vmul.f32 %v1188, 0.01
  %v1193 = vsel %vm1191, %v1188, %v1192
  %v1194 = vld [vmem:[%s5] sm:$0xff]
  %v1195 = vld [vmem:[%s5 + $0x8] sm:$0xff]
  %v1196 = vld [vmem:[%s5 + $0x10] sm:$0xff]
  %v1197 = vld [vmem:[%s5 + $0x18] sm:$0xff]
  %v1198 = vld [vmem:[%s6 + $0x4] sm:$0x1]
  %v1200 = vlaneseq
  %v1201 = vshrl.u32 %v1200, 7
  %v1202 = vsub.s32 0, %v1201
  %v1203 = vrot.slane %v1198, %v1202
  %v1206 = vsel %vm185, %v1193, 0
  %1208 = vmatprep.subr.mxu0 0.0
  %1209 = vmatpush1.msra.mxu0 %v1194
  %1210 = vmatprep.subr.mxu0 0.0
  %1211 = vmatpush1.msra.mxu0 %v1195
  %1212 = vmatprep.subr.mxu0 0.0
  %1213 = vmatpush1.msra.mxu0 %v1196
  %1214 = vmatprep.subr.mxu0 0.0
  %1215 = vmatpush1.msra.mxu0 %v1197
  %1216 = vmatprep.subr.mxu0 0.0
  %1217 = vmatpush1.msra.mxu0 0.0
  %1218 = vmatprep.subr.mxu0 0.0
  %1219 = vmatpush1.msra.mxu0 0.0
  %1220 = vmatprep.subr.mxu0 0.0
  %1221 = vmatpush1.msra.mxu0 0.0
  %1222 = vmatprep.subr.mxu0 0.0
  %1223 = vmatpush1.msra.mxu0 0.0
  %1224 = vmatprep.subr.mxu0 0.0
  %1225 = vmatpush1.msra.mxu0 0.0
  %1226 = vmatprep.subr.mxu0 0.0
  %1227 = vmatpush1.msra.mxu0 0.0
  %1228 = vmatprep.subr.mxu0 0.0
  %1229 = vmatpush1.msra.mxu0 0.0
  %1230 = vmatprep.subr.mxu0 0.0
  %1231 = vmatpush1.msra.mxu0 0.0
  %1232 = vmatprep.subr.mxu0 0.0
  %1233 = vmatpush1.msra.mxu0 0.0
  %1234 = vmatprep.subr.mxu0 0.0
  %1235 = vmatpush1.msra.mxu0 0.0
  %1236 = vmatprep.subr.mxu0 0.0
  %1237 = vmatpush1.msra.mxu0 0.0
  %1238 = vmatprep.subr.mxu0 0.0
  %1239 = vmatpush1.msra.mxu0 0.0
  %1240 = vmatprep.subr.mxu0 0.0
  %1241 = vmatpush1.msra.mxu0 0.0
  %1242 = vmatprep.subr.mxu0 0.0
  %1243 = vmatpush1.msra.mxu0 0.0
  %1244 = vmatprep.subr.mxu0 0.0
  %1245 = vmatpush1.msra.mxu0 0.0
  %1246 = vmatprep.subr.mxu0 0.0
  %1247 = vmatpush1.msra.mxu0 0.0
  %1248 = vmatprep.subr.mxu0 0.0
  %1249 = vmatpush1.msra.mxu0 0.0
  %1250 = vmatprep.subr.mxu0 0.0
  %1251 = vmatpush1.msra.mxu0 0.0
  %1252 = vmatprep.subr.mxu0 0.0
  %1253 = vmatpush1.msra.mxu0 0.0
  %1254 = vmatprep.subr.mxu0 0.0
  %1255 = vmatpush1.msra.mxu0 0.0
  %1256 = vmatprep.subr.mxu0 0.0
  %1257 = vmatpush1.msra.mxu0 0.0
  %1258 = vmatprep.subr.mxu0 0.0
  %1259 = vmatpush1.msra.mxu0 0.0
  %1260 = vmatprep.subr.mxu0 0.0
  %1261 = vmatpush1.msra.mxu0 0.0
  %1262 = vmatprep.subr.mxu0 0.0
  %1263 = vmatpush1.msra.mxu0 0.0
  %1264 = vmatprep.subr.mxu0 0.0
  %1265 = vmatpush1.msra.mxu0 0.0
  %1266 = vmatprep.subr.mxu0 0.0
  %1267 = vmatpush1.msra.mxu0 0.0
  %1268 = vmatprep.subr.mxu0 0.0
  %1269 = vmatpush1.msra.mxu0 0.0
  %1270 = vmatprep.subr.mxu0 0.0
  %1271 = vmatpush1.msra.mxu0 0.0
  %1272 = vmatprep.mubr.f32.mxu0 0.0
  %1273 = vmatmul.mubr.f32.gmra.mrb[0].mxu0 %v1206
  %v1274 = vpop.f32.mrb[0].mxu0
  %v1275 = vadd.f32 %v1203, %v1274
  %v1276 = vpop.f32.mrb[0].mxu0
  %1277 = vdwg.mxu0
  %vm1278 = vcmask 23552
  %1279 = vst.msk [vmem:[%s7] sm:$0xff] %vm1278, %v1275
  // Predicated region
  $region30: #{tpu_custom_call.1} parent=0 // pred_check
    _
  $region31: #{tpu_custom_call.1} parent=0 // pred_check_branch
    %1281 = sbr.rel (0) target = $region33
  $region32: #{tpu_custom_call.1} parent=0 // pred_region
    _
  $region33: #{tpu_custom_call.1} parent=0 // pred_fallthru
    _
  // Predicated region
  $region34: #{tpu_custom_call.1} parent=0 // pred_check
    _
  $region35: #{tpu_custom_call.1} parent=0 // pred_check_branch
    %1283 = sbr.rel (0) target = $region37
  $region36: #{tpu_custom_call.1} parent=0 // pred_region
    _
  $region37: #{tpu_custom_call.1} parent=0 // pred_fallthru
    _

</llo_original>
